<compile_context>
chip_gen: v7x
topology: tpu7x:2x2x1
jax: 0.10.0
libtpu: 0.0.40
codegen_flags: <defaults>
</compile_context>

<pallas_src>
import numpy as np
import jax
import jax.numpy as jnp
from jax.experimental import pallas as pl
from jax.experimental.pallas import tpu as pltpu


# ----------------------------------------------------------------------------
# Pallas kernel: Conv2d(C -> C//2, 3x3, pad 1) -> ReLU -> Conv2d(C//2 -> 1, 1x1)
#                -> sigmoid -> mean over one spatial axis (as probs @ pool)
# ----------------------------------------------------------------------------
def _make_kernel(H, W, N, bb):
    taps = [(dy, dx) for dy in (-1, 0, 1) for dx in (-1, 0, 1)]

    def kernel(x_ref, w1_ref, b1_ref, w2_ref, b2_ref, pool_ref,
               logit_ref, cls_ref):
        # Lane (flattened spatial) index and column index, hoisted out of all
        # loops (masks do not depend on the image).
        lane = jax.lax.broadcasted_iota(jnp.int32, (1, N), 1)   # (1, N)
        col = lane % W

        tap_masks = []
        for dy, dx in taps:
            conds = []
            if dx == 1:
                conds.append(col != (W - 1))
            elif dx == -1:
                conds.append(col != 0)
            if dy == 1:
                conds.append(lane < (H - 1) * W)
            elif dy == -1:
                conds.append(lane >= W)
            valid = None
            for c in conds:
                valid = c if valid is None else jnp.logical_and(valid, c)
            tap_masks.append(valid)

        w1 = w1_ref[...]          # (Cmid, 9*C)  matmul dtype
        b1 = b1_ref[...]          # (Cmid, 1)    f32
        w2 = w2_ref[...]          # (1, Cmid)    f32
        b2 = b2_ref[0]            # scalar       f32 (SMEM)

        logit_rows = []
        for b in range(bb):       # static, whole batch in this one grid step
            xb = x_ref[b]         # (C, N)  -- lane-dense load
            pieces = []
            for (dy, dx), valid in zip(taps, tap_masks):
                off = dy * W + dx
                k = off % N
                if k == 0:
                    sh = xb
                else:
                    # sh[:, n] = xb[:, (n + off) mod N]; wrapped positions are
                    # exactly the out-of-image ones and get masked below.
                    sh = jnp.concatenate([xb[:, k:], xb[:, :k]], axis=-1)
                if valid is not None:
                    sh = jnp.where(valid, sh, jnp.zeros_like(sh))
                pieces.append(sh)
            patch = jnp.concatenate(pieces, axis=0)     # (9*C, N)

            # conv1 (3x3) as ONE MXU matmul with K = 9*C, f32 accumulation.
            h = jnp.dot(w1, patch, preferred_element_type=jnp.float32)
            h = jnp.maximum(h + b1, 0.0)                # (Cmid, N), ReLU
            # conv2 (1x1) to a single output channel -> lane-dense row.
            row = jnp.dot(w2, h, preferred_element_type=jnp.float32) + b2
            logit_rows.append(row)                      # (1, N)

        logit = (jnp.concatenate(logit_rows, axis=0)
                 if bb > 1 else logit_rows[0])          # (bb, N)
        logit_ref[...] = logit

        probs = jax.nn.sigmoid(logit)                   # (bb, N) f32
        # mean over H ('col') / W ('row') == probs @ pool; output is already
        # padded to a 128-lane-dense slab by the pooling matrix.
        cls_ref[...] = jnp.dot(probs, pool_ref[...],
                               preferred_element_type=jnp.float32)

    return kernel


def segment_predictor_pallas(feats, w1, b1, w2, b2, type_, *,
                             batch_block=None, compute_dtype=jnp.float32):
    """Conv(3x3)+ReLU+Conv(1x1) -> sigmoid -> mean over one spatial axis.

    feats: (B, C, H, W) NCHW (PyTorch layout).
    w1:    (Cmid, C, 3, 3) OIHW conv1 weight;   b1: (Cmid,) conv1 bias.
    w2:    (1, Cmid, 1, 1)  conv2 weight;       b2: (1,)    conv2 bias.
    compute_dtype: jnp.float32 (default, exact) or jnp.bfloat16 for the conv1
    matmul operands (halves feats HBM traffic; f32 accumulation) on v6e/v7x.

    Returns (segments_logit [B, H, W] f32, cls_probs [B, L] f32) with
    L = W for type_='col' and L = H for type_='row'.
    """
    B, C, H, W = feats.shape
    Cmid = w1.shape[0]
    N = H * W
    L = W if type_ == 'col' else H
    Lpad = 128 * pl.cdiv(L, 128)

    bb = B if batch_block is None else batch_block
    # Whole batch per grid step by default (amortizes per-step overhead).
    # For very large B (or for v7x 2-TC sharding) a smaller bb may be used, but
    # it must keep the 2-D output blocks tile-legal.
    assert bb == B or (B % bb == 0 and bb % 8 == 0), \
        "batch_block must equal B, or be a multiple of 8 dividing B"
    num_steps = B // bb

    # Free reshape of the contiguous NCHW tensor: spatial -> lane axis.
    x_flat = feats.reshape(B, C, N).astype(compute_dtype)

    # conv1 weight -> (Cmid, 9*C), tap-major to match the in-kernel patch.
    w1_km = jnp.transpose(w1, (0, 2, 3, 1)).reshape(Cmid, 9 * C)
    w1_km = w1_km.astype(compute_dtype)
    b1_col = b1.reshape(Cmid, 1).astype(jnp.float32)
    w2_row = w2.reshape(1, Cmid).astype(jnp.float32)
    b2_s = b2.reshape(1).astype(jnp.float32)

    # Pooling matrix: probs (bb, N) @ pool (N, Lpad) == mean over H or W,
    # already padded to a 128-lane output (columns >= L are zero).
    n = np.arange(N)
    if type_ == 'col':
        idx, denom = n % W, float(H)
    else:
        idx, denom = n // W, float(W)
    pool_np = np.zeros((N, Lpad), np.float32)
    pool_np[n, idx] = 1.0 / denom
    pool = jnp.asarray(pool_np)

    kernel = _make_kernel(H, W, N, bb)

    logit_flat, cls_pad = pl.pallas_call(
        kernel,
        out_shape=(
            jax.ShapeDtypeStruct((B, N), jnp.float32),
            jax.ShapeDtypeStruct((B, Lpad), jnp.float32),
        ),
        grid=(num_steps,),
        in_specs=[
            pl.BlockSpec((bb, C, N), lambda i: (i, 0, 0)),
            pl.BlockSpec((Cmid, 9 * C), lambda i: (0, 0)),
            pl.BlockSpec((Cmid, 1), lambda i: (0, 0)),
            pl.BlockSpec((1, Cmid), lambda i: (0, 0)),
            pl.BlockSpec(memory_space=pltpu.MemorySpace.SMEM),   # scalar b2
            pl.BlockSpec((N, Lpad), lambda i: (0, 0)),
        ],
        out_specs=(
            pl.BlockSpec((bb, N), lambda i: (i, 0)),
            pl.BlockSpec((bb, Lpad), lambda i: (i, 0)),
        ),
        compiler_params=pltpu.CompilerParams(
            dimension_semantics=("parallel",),
            vmem_limit_bytes=32 * 1024 * 1024),
    )(x_flat, w1_km, b1_col, w2_row, b2_s, pool)

    # Free reshape back to (B, H, W); drop the lane padding of cls.
    return logit_flat.reshape(B, H, W), cls_pad[:, :L]


# ----------------------------------------------------------------------------
# Host-side post-processing (mirrors cal_segments / cls_logits_to_segments
# with spans=fg_spans in the eval-mode forward).  Pure Python on
# data-dependent span lists; not a kernel candidate.
# ----------------------------------------------------------------------------
def cal_segments_np(cls_probs_1d, spans, scale=1.0):
    segments = []
    for span in spans:
        s, e = int(span[0] * scale), int(span[1] * scale)
        seg = int(np.argmax(cls_probs_1d[s:e])) + s
        segments.append(int(seg / scale))
    return segments


def segment_predictor_forward(feats, images_size, fg_spans,
                              w1, b1, w2, b2, type_='col', scale=1,
                              threshold=0.5, compute_dtype=jnp.float32):
    """Eval-mode SegmentPredictor.forward."""
    # PyTorch forward reverses each image_size: (w, h) -> (h, w).
    images_size = [tuple(s[::-1]) for s in images_size]

    logit, cls_probs = segment_predictor_pallas(
        feats, w1, b1, w2, b2, type_, compute_dtype=compute_dtype)
    cls_np = np.asarray(jax.device_get(cls_probs))

    # lengths from gen_masks(): sum of the first mask row/col == scaled w / h.
    if type_ == 'col':
        lengths = [int(hw[1] * scale) for hw in images_size]
    else:
        lengths = [int(hw[0] * scale) for hw in images_size]

    pred_segments = []
    for b in range(feats.shape[0]):
        pred_segments.append(
            cal_segments_np(cls_np[b, :lengths[b]], fg_spans[b], scale))

    result_info, ext_info = {}, {}
    # TODO(synk): training branch (BCE loss / gen_targets / precision-recall)
    # is not exercised by the eval forward path and is not implemented here.
    return pred_segments, result_info, ext_info, logit, cls_probs


# ----------------------------------------------------------------------------
# Pure-JAX reference (for a correctness check of the Pallas kernel).
# ----------------------------------------------------------------------------
def _ref_forward(feats, w1, b1, w2, b2, type_):
    h = jax.lax.conv_general_dilated(
        feats, w1, (1, 1), 'SAME',
        dimension_numbers=('NCHW', 'OIHW', 'NCHW'))
    h = jnp.maximum(h + b1.reshape(1, -1, 1, 1), 0.0)
    logit = jnp.einsum('bchw,c->bhw', h, w2.reshape(-1)) + b2[0]
    probs = jax.nn.sigmoid(logit)
    cls = probs.mean(axis=1) if type_ == 'col' else probs.mean(axis=2)
    return logit, cls


if __name__ == "__main__":
    key = jax.random.PRNGKey(0)
    B, C, H, W = 2, 32, 16, 16          # in_dim = 32
    Cmid = C // 2

    k1, k2, k3, k4, k5 = jax.random.split(key, 5)
    feats = jax.random.normal(k1, (B, C, H, W), jnp.float32)
    # PyTorch-native parameter layouts (nn.Conv2d): OIHW weights, 1-D biases.
    w1 = 0.1 * jax.random.normal(k2, (Cmid, C, 3, 3), jnp.float32)
    b1 = 0.1 * jax.random.normal(k3, (Cmid,), jnp.float32)
    w2 = 0.1 * jax.random.normal(k4, (1, Cmid, 1, 1), jnp.float32)
    b2 = 0.1 * jax.random.normal(k5, (1,), jnp.float32)

    images_size = [(16, 16), (14, 12)]                  # (w, h), PyTorch convention
    fg_spans = [[[0, 4], [8, 12]], [[2, 6], [10, 13]]]  # per-batch column spans

    pred_segments, result_info, ext_info, logit, cls_probs = \
        segment_predictor_forward(feats, images_size, fg_spans,
                                  w1, b1, w2, b2, type_='col',
                                  scale=1, threshold=0.5)
    jax.block_until_ready(cls_probs)

    # f32 correctness check against a pure-JAX reference for both axis types.
    for t in ('col', 'row'):
        k_logit, k_cls = segment_predictor_pallas(feats, w1, b1, w2, b2, t)
        r_logit, r_cls = _ref_forward(feats, w1, b1, w2, b2, t)
        np.testing.assert_allclose(np.asarray(k_logit), np.asarray(r_logit),
                                   rtol=1e-4, atol=1e-5)
        np.testing.assert_allclose(np.asarray(k_cls), np.asarray(r_cls),
                                   rtol=1e-4, atol=1e-5)

    # bf16 matmul-operand path (v6e / v7x optimization), f32 accumulation.
    kb_logit, kb_cls = segment_predictor_pallas(
        feats, w1, b1, w2, b2, 'col', compute_dtype=jnp.bfloat16)
    r_logit, r_cls = _ref_forward(feats, w1, b1, w2, b2, 'col')
    np.testing.assert_allclose(np.asarray(kb_logit), np.asarray(r_logit),
                               rtol=5e-2, atol=5e-2)
    np.testing.assert_allclose(np.asarray(kb_cls), np.asarray(r_cls),
                               rtol=5e-2, atol=5e-2)

    print("KERNEL_OK")
</pallas_src>

<mosaic_0001>
module attributes {stable_mosaic.version = 11 : i64} {
  func.func @kernel(%arg0: i32, %arg1: memref<2x32x256xf32, #tpu.memory_space<vmem>>, %arg2: memref<16x288xf32, #tpu.memory_space<vmem>>, %arg3: memref<16x1xf32, #tpu.memory_space<vmem>>, %arg4: memref<1x16xf32, #tpu.memory_space<vmem>>, %arg5: memref<1xf32, #tpu.memory_space<smem>>, %arg6: memref<256x128xf32, #tpu.memory_space<vmem>>, %arg7: memref<2x256xf32, #tpu.memory_space<vmem>>, %arg8: memref<2x128xf32, #tpu.memory_space<vmem>>) attributes {dimension_semantics = [#tpu.dimension_semantics<parallel>], iteration_bounds = array<i64: 1>, scalar_prefetch = 0 : i64, scratch_operands = 0 : i64, tpu.core_type = #tpu.core_type<tc>, window_params = [{transform_indices = @transform_0, window_bounds = array<i64: 2, 32, 256>}, {pipeline_mode = #tpu.pipeline_mode<synchronous>, transform_indices = @transform_1, window_bounds = array<i64: 16, 288>}, {pipeline_mode = #tpu.pipeline_mode<synchronous>, transform_indices = @transform_2, window_bounds = array<i64: 16, 1>}, {pipeline_mode = #tpu.pipeline_mode<synchronous>, transform_indices = @transform_3, window_bounds = array<i64: 1, 16>}, {transform_indices = @transform_4, window_bounds = array<i64: 1>}, {pipeline_mode = #tpu.pipeline_mode<synchronous>, transform_indices = @transform_5, window_bounds = array<i64: 256, 128>}, {transform_indices = @transform_6, window_bounds = array<i64: 2, 256>}, {transform_indices = @transform_7, window_bounds = array<i64: 2, 128>}]} {
    %0 = tpu.iota {dimensions = array<i32: 1>} : vector<1x256xi32>
    %c16_i32 = arith.constant 16 : i32
    %c0_i32 = arith.constant 0 : i32
    %1 = arith.cmpi eq, %c16_i32, %c0_i32 : i32
    %c1_i32 = arith.constant 1 : i32
    %2 = arith.select %1, %c1_i32, %c16_i32 : i32
    %3 = vector.broadcast %2 : i32 to vector<1x256xi32>
    %4 = arith.remsi %0, %3 : vector<1x256xi32>
    %c0_i32_0 = arith.constant 0 : i32
    %5 = vector.broadcast %c0_i32_0 : i32 to vector<1x256xi32>
    %6 = arith.cmpi ne, %4, %5 : vector<1x256xi32>
    %c0_i32_1 = arith.constant 0 : i32
    %7 = vector.broadcast %c0_i32_1 : i32 to vector<1x256xi32>
    %8 = arith.cmpi slt, %4, %7 : vector<1x256xi32>
    %c0_i32_2 = arith.constant 0 : i32
    %9 = arith.cmpi slt, %2, %c0_i32_2 : i32
    %10 = vector.broadcast %9 : i1 to vector<1x256xi1>
    %11 = vector.broadcast %10 : vector<1x256xi1> to vector<1x256xi1>
    %12 = arith.xori %8, %11 : vector<1x256xi1>
    %13 = arith.andi %12, %6 : vector<1x256xi1>
    %14 = vector.broadcast %2 : i32 to vector<1x256xi32>
    %15 = arith.addi %4, %14 : vector<1x256xi32>
    %16 = arith.select %13, %15, %4 : vector<1x256xi1>, vector<1x256xi32>
    %c0_i32_3 = arith.constant 0 : i32
    %17 = vector.broadcast %c0_i32_3 : i32 to vector<1x256xi32>
    %18 = arith.cmpi ne, %16, %17 : vector<1x256xi32>
    %c16_i32_4 = arith.constant 16 : i32
    %19 = vector.broadcast %c16_i32_4 : i32 to vector<1x256xi32>
    %20 = arith.cmpi sge, %0, %19 : vector<1x256xi32>
    %21 = arith.andi %18, %20 : vector<1x256xi1>
    %c16_i32_5 = arith.constant 16 : i32
    %22 = vector.broadcast %c16_i32_5 : i32 to vector<1x256xi32>
    %23 = arith.cmpi sge, %0, %22 : vector<1x256xi32>
    %c15_i32 = arith.constant 15 : i32
    %24 = vector.broadcast %c15_i32 : i32 to vector<1x256xi32>
    %25 = arith.cmpi ne, %16, %24 : vector<1x256xi32>
    %c16_i32_6 = arith.constant 16 : i32
    %26 = vector.broadcast %c16_i32_6 : i32 to vector<1x256xi32>
    %27 = arith.cmpi sge, %0, %26 : vector<1x256xi32>
    %28 = arith.andi %25, %27 : vector<1x256xi1>
    %c0_i32_7 = arith.constant 0 : i32
    %29 = vector.broadcast %c0_i32_7 : i32 to vector<1x256xi32>
    %30 = arith.cmpi ne, %16, %29 : vector<1x256xi32>
    %c15_i32_8 = arith.constant 15 : i32
    %31 = vector.broadcast %c15_i32_8 : i32 to vector<1x256xi32>
    %32 = arith.cmpi ne, %16, %31 : vector<1x256xi32>
    %c0_i32_9 = arith.constant 0 : i32
    %33 = vector.broadcast %c0_i32_9 : i32 to vector<1x256xi32>
    %34 = arith.cmpi ne, %16, %33 : vector<1x256xi32>
    %c240_i32 = arith.constant 240 : i32
    %35 = vector.broadcast %c240_i32 : i32 to vector<1x256xi32>
    %36 = arith.cmpi slt, %0, %35 : vector<1x256xi32>
    %37 = arith.andi %34, %36 : vector<1x256xi1>
    %c240_i32_10 = arith.constant 240 : i32
    %38 = vector.broadcast %c240_i32_10 : i32 to vector<1x256xi32>
    %39 = arith.cmpi slt, %0, %38 : vector<1x256xi32>
    %c15_i32_11 = arith.constant 15 : i32
    %40 = vector.broadcast %c15_i32_11 : i32 to vector<1x256xi32>
    %41 = arith.cmpi ne, %16, %40 : vector<1x256xi32>
    %c240_i32_12 = arith.constant 240 : i32
    %42 = vector.broadcast %c240_i32_12 : i32 to vector<1x256xi32>
    %43 = arith.cmpi slt, %0, %42 : vector<1x256xi32>
    %44 = arith.andi %41, %43 : vector<1x256xi1>
    %c0 = arith.constant 0 : index
    %c0_13 = arith.constant 0 : index
    %45 = vector.load %arg2[%c0, %c0_13] : memref<16x288xf32, #tpu.memory_space<vmem>>, vector<16x288xf32>
    %c0_14 = arith.constant 0 : index
    %c0_15 = arith.constant 0 : index
    %46 = vector.load %arg3[%c0_14, %c0_15] : memref<16x1xf32, #tpu.memory_space<vmem>>, vector<16x1xf32>
    %c0_16 = arith.constant 0 : index
    %c0_17 = arith.constant 0 : index
    %47 = vector.load %arg4[%c0_16, %c0_17] : memref<1x16xf32, #tpu.memory_space<vmem>>, vector<1x16xf32>
    %c0_18 = arith.constant 0 : index
    %48 = memref.load %arg5[%c0_18] : memref<1xf32, #tpu.memory_space<smem>>
    %c0_19 = arith.constant 0 : index
    %c0_20 = arith.constant 0 : index
    %c0_21 = arith.constant 0 : index
    %49 = vector.load %arg1[%c0_19, %c0_20, %c0_21] : memref<2x32x256xf32, #tpu.memory_space<vmem>>, vector<1x32x256xf32>
    %50 = vector.shape_cast %49 : vector<1x32x256xf32> to vector<32x256xf32>
    %51 = vector.extract_strided_slice %50 {offsets = [0, 239], sizes = [32, 17], strides = [1, 1]} : vector<32x256xf32> to vector<32x17xf32>
    %52 = vector.extract_strided_slice %50 {offsets = [0, 0], sizes = [32, 239], strides = [1, 1]} : vector<32x256xf32> to vector<32x239xf32>
    %53 = tpu.concatenate %51, %52 in 1 : vector<32x17xf32>, vector<32x239xf32> -> vector<32x256xf32>
    %cst = arith.constant 0.000000e+00 : f32
    %54 = vector.broadcast %cst : f32 to vector<32x256xf32>
    %55 = vector.shape_cast %21 : vector<1x256xi1> to vector<1x256xi1>
    %56 = vector.broadcast %55 : vector<1x256xi1> to vector<32x256xi1>
    %57 = arith.select %56, %53, %54 : vector<32x256xi1>, vector<32x256xf32>
    %58 = vector.extract_strided_slice %50 {offsets = [0, 240], sizes = [32, 16], strides = [1, 1]} : vector<32x256xf32> to vector<32x16xf32>
    %59 = vector.extract_strided_slice %50 {offsets = [0, 0], sizes = [32, 240], strides = [1, 1]} : vector<32x256xf32> to vector<32x240xf32>
    %60 = tpu.concatenate %58, %59 in 1 : vector<32x16xf32>, vector<32x240xf32> -> vector<32x256xf32>
    %cst_22 = arith.constant 0.000000e+00 : f32
    %61 = vector.broadcast %cst_22 : f32 to vector<32x256xf32>
    %62 = vector.shape_cast %23 : vector<1x256xi1> to vector<1x256xi1>
    %63 = vector.broadcast %62 : vector<1x256xi1> to vector<32x256xi1>
    %64 = arith.select %63, %60, %61 : vector<32x256xi1>, vector<32x256xf32>
    %65 = vector.extract_strided_slice %50 {offsets = [0, 241], sizes = [32, 15], strides = [1, 1]} : vector<32x256xf32> to vector<32x15xf32>
    %66 = vector.extract_strided_slice %50 {offsets = [0, 0], sizes = [32, 241], strides = [1, 1]} : vector<32x256xf32> to vector<32x241xf32>
    %67 = tpu.concatenate %65, %66 in 1 : vector<32x15xf32>, vector<32x241xf32> -> vector<32x256xf32>
    %cst_23 = arith.constant 0.000000e+00 : f32
    %68 = vector.broadcast %cst_23 : f32 to vector<32x256xf32>
    %69 = vector.shape_cast %28 : vector<1x256xi1> to vector<1x256xi1>
    %70 = vector.broadcast %69 : vector<1x256xi1> to vector<32x256xi1>
    %71 = arith.select %70, %67, %68 : vector<32x256xi1>, vector<32x256xf32>
    %72 = vector.extract_strided_slice %50 {offsets = [0, 255], sizes = [32, 1], strides = [1, 1]} : vector<32x256xf32> to vector<32x1xf32>
    %73 = vector.extract_strided_slice %50 {offsets = [0, 0], sizes = [32, 255], strides = [1, 1]} : vector<32x256xf32> to vector<32x255xf32>
    %74 = tpu.concatenate %72, %73 in 1 : vector<32x1xf32>, vector<32x255xf32> -> vector<32x256xf32>
    %cst_24 = arith.constant 0.000000e+00 : f32
    %75 = vector.broadcast %cst_24 : f32 to vector<32x256xf32>
    %76 = vector.shape_cast %30 : vector<1x256xi1> to vector<1x256xi1>
    %77 = vector.broadcast %76 : vector<1x256xi1> to vector<32x256xi1>
    %78 = arith.select %77, %74, %75 : vector<32x256xi1>, vector<32x256xf32>
    %79 = vector.extract_strided_slice %50 {offsets = [0, 1], sizes = [32, 255], strides = [1, 1]} : vector<32x256xf32> to vector<32x255xf32>
    %80 = vector.extract_strided_slice %50 {offsets = [0, 0], sizes = [32, 1], strides = [1, 1]} : vector<32x256xf32> to vector<32x1xf32>
    %81 = tpu.concatenate %79, %80 in 1 : vector<32x255xf32>, vector<32x1xf32> -> vector<32x256xf32>
    %cst_25 = arith.constant 0.000000e+00 : f32
    %82 = vector.broadcast %cst_25 : f32 to vector<32x256xf32>
    %83 = vector.shape_cast %32 : vector<1x256xi1> to vector<1x256xi1>
    %84 = vector.broadcast %83 : vector<1x256xi1> to vector<32x256xi1>
    %85 = arith.select %84, %81, %82 : vector<32x256xi1>, vector<32x256xf32>
    %86 = vector.extract_strided_slice %50 {offsets = [0, 15], sizes = [32, 241], strides = [1, 1]} : vector<32x256xf32> to vector<32x241xf32>
    %87 = vector.extract_strided_slice %50 {offsets = [0, 0], sizes = [32, 15], strides = [1, 1]} : vector<32x256xf32> to vector<32x15xf32>
    %88 = tpu.concatenate %86, %87 in 1 : vector<32x241xf32>, vector<32x15xf32> -> vector<32x256xf32>
    %cst_26 = arith.constant 0.000000e+00 : f32
    %89 = vector.broadcast %cst_26 : f32 to vector<32x256xf32>
    %90 = vector.shape_cast %37 : vector<1x256xi1> to vector<1x256xi1>
    %91 = vector.broadcast %90 : vector<1x256xi1> to vector<32x256xi1>
    %92 = arith.select %91, %88, %89 : vector<32x256xi1>, vector<32x256xf32>
    %93 = vector.extract_strided_slice %50 {offsets = [0, 16], sizes = [32, 240], strides = [1, 1]} : vector<32x256xf32> to vector<32x240xf32>
    %94 = vector.extract_strided_slice %50 {offsets = [0, 0], sizes = [32, 16], strides = [1, 1]} : vector<32x256xf32> to vector<32x16xf32>
    %95 = tpu.concatenate %93, %94 in 1 : vector<32x240xf32>, vector<32x16xf32> -> vector<32x256xf32>
    %cst_27 = arith.constant 0.000000e+00 : f32
    %96 = vector.broadcast %cst_27 : f32 to vector<32x256xf32>
    %97 = vector.shape_cast %39 : vector<1x256xi1> to vector<1x256xi1>
    %98 = vector.broadcast %97 : vector<1x256xi1> to vector<32x256xi1>
    %99 = arith.select %98, %95, %96 : vector<32x256xi1>, vector<32x256xf32>
    %100 = vector.extract_strided_slice %50 {offsets = [0, 17], sizes = [32, 239], strides = [1, 1]} : vector<32x256xf32> to vector<32x239xf32>
    %101 = vector.extract_strided_slice %50 {offsets = [0, 0], sizes = [32, 17], strides = [1, 1]} : vector<32x256xf32> to vector<32x17xf32>
    %102 = tpu.concatenate %100, %101 in 1 : vector<32x239xf32>, vector<32x17xf32> -> vector<32x256xf32>
    %cst_28 = arith.constant 0.000000e+00 : f32
    %103 = vector.broadcast %cst_28 : f32 to vector<32x256xf32>
    %104 = vector.shape_cast %44 : vector<1x256xi1> to vector<1x256xi1>
    %105 = vector.broadcast %104 : vector<1x256xi1> to vector<32x256xi1>
    %106 = arith.select %105, %102, %103 : vector<32x256xi1>, vector<32x256xf32>
    %107 = tpu.concatenate %57, %64, %71, %78, %50, %85, %92, %99, %106 in 0 : vector<32x256xf32>, vector<32x256xf32>, vector<32x256xf32>, vector<32x256xf32>, vector<32x256xf32>, vector<32x256xf32>, vector<32x256xf32>, vector<32x256xf32>, vector<32x256xf32> -> vector<288x256xf32>
    %cst_29 = arith.constant dense<0.000000e+00> : vector<16x256xf32>
    %108 = tpu.matmul %45, %107, %cst_29 {dimension_numbers = #tpu.dot_dimension_numbers<[1], [0], [0], [1], [0, 0, 1, 1], [], []>} : vector<16x288xf32>, vector<288x256xf32>, vector<16x256xf32> -> vector<16x256xf32>
    %109 = vector.broadcast %46 : vector<16x1xf32> to vector<16x256xf32>
    %110 = arith.addf %108, %109 : vector<16x256xf32>
    %cst_30 = arith.constant 0.000000e+00 : f32
    %111 = vector.broadcast %cst_30 : f32 to vector<16x256xf32>
    %112 = arith.maximumf %110, %111 : vector<16x256xf32>
    %cst_31 = arith.constant dense<0.000000e+00> : vector<1x256xf32>
    %113 = tpu.matmul %47, %112, %cst_31 {dimension_numbers = #tpu.dot_dimension_numbers<[1], [0], [0], [1], [0, 0, 1, 1], [], []>} : vector<1x16xf32>, vector<16x256xf32>, vector<1x256xf32> -> vector<1x256xf32>
    %114 = vector.broadcast %48 : f32 to vector<1x256xf32>
    %115 = arith.addf %113, %114 : vector<1x256xf32>
    %c1 = arith.constant 1 : index
    %c0_32 = arith.constant 0 : index
    %c0_33 = arith.constant 0 : index
    %116 = vector.load %arg1[%c1, %c0_32, %c0_33] : memref<2x32x256xf32, #tpu.memory_space<vmem>>, vector<1x32x256xf32>
    %117 = vector.shape_cast %116 : vector<1x32x256xf32> to vector<32x256xf32>
    %118 = vector.extract_strided_slice %117 {offsets = [0, 239], sizes = [32, 17], strides = [1, 1]} : vector<32x256xf32> to vector<32x17xf32>
    %119 = vector.extract_strided_slice %117 {offsets = [0, 0], sizes = [32, 239], strides = [1, 1]} : vector<32x256xf32> to vector<32x239xf32>
    %120 = tpu.concatenate %118, %119 in 1 : vector<32x17xf32>, vector<32x239xf32> -> vector<32x256xf32>
    %cst_34 = arith.constant 0.000000e+00 : f32
    %121 = vector.broadcast %cst_34 : f32 to vector<32x256xf32>
    %122 = vector.shape_cast %21 : vector<1x256xi1> to vector<1x256xi1>
    %123 = vector.broadcast %122 : vector<1x256xi1> to vector<32x256xi1>
    %124 = arith.select %123, %120, %121 : vector<32x256xi1>, vector<32x256xf32>
    %125 = vector.extract_strided_slice %117 {offsets = [0, 240], sizes = [32, 16], strides = [1, 1]} : vector<32x256xf32> to vector<32x16xf32>
    %126 = vector.extract_strided_slice %117 {offsets = [0, 0], sizes = [32, 240], strides = [1, 1]} : vector<32x256xf32> to vector<32x240xf32>
    %127 = tpu.concatenate %125, %126 in 1 : vector<32x16xf32>, vector<32x240xf32> -> vector<32x256xf32>
    %cst_35 = arith.constant 0.000000e+00 : f32
    %128 = vector.broadcast %cst_35 : f32 to vector<32x256xf32>
    %129 = vector.shape_cast %23 : vector<1x256xi1> to vector<1x256xi1>
    %130 = vector.broadcast %129 : vector<1x256xi1> to vector<32x256xi1>
    %131 = arith.select %130, %127, %128 : vector<32x256xi1>, vector<32x256xf32>
    %132 = vector.extract_strided_slice %117 {offsets = [0, 241], sizes = [32, 15], strides = [1, 1]} : vector<32x256xf32> to vector<32x15xf32>
    %133 = vector.extract_strided_slice %117 {offsets = [0, 0], sizes = [32, 241], strides = [1, 1]} : vector<32x256xf32> to vector<32x241xf32>
    %134 = tpu.concatenate %132, %133 in 1 : vector<32x15xf32>, vector<32x241xf32> -> vector<32x256xf32>
    %cst_36 = arith.constant 0.000000e+00 : f32
    %135 = vector.broadcast %cst_36 : f32 to vector<32x256xf32>
    %136 = vector.shape_cast %28 : vector<1x256xi1> to vector<1x256xi1>
    %137 = vector.broadcast %136 : vector<1x256xi1> to vector<32x256xi1>
    %138 = arith.select %137, %134, %135 : vector<32x256xi1>, vector<32x256xf32>
    %139 = vector.extract_strided_slice %117 {offsets = [0, 255], sizes = [32, 1], strides = [1, 1]} : vector<32x256xf32> to vector<32x1xf32>
    %140 = vector.extract_strided_slice %117 {offsets = [0, 0], sizes = [32, 255], strides = [1, 1]} : vector<32x256xf32> to vector<32x255xf32>
    %141 = tpu.concatenate %139, %140 in 1 : vector<32x1xf32>, vector<32x255xf32> -> vector<32x256xf32>
    %cst_37 = arith.constant 0.000000e+00 : f32
    %142 = vector.broadcast %cst_37 : f32 to vector<32x256xf32>
    %143 = vector.shape_cast %30 : vector<1x256xi1> to vector<1x256xi1>
    %144 = vector.broadcast %143 : vector<1x256xi1> to vector<32x256xi1>
    %145 = arith.select %144, %141, %142 : vector<32x256xi1>, vector<32x256xf32>
    %146 = vector.extract_strided_slice %117 {offsets = [0, 1], sizes = [32, 255], strides = [1, 1]} : vector<32x256xf32> to vector<32x255xf32>
    %147 = vector.extract_strided_slice %117 {offsets = [0, 0], sizes = [32, 1], strides = [1, 1]} : vector<32x256xf32> to vector<32x1xf32>
    %148 = tpu.concatenate %146, %147 in 1 : vector<32x255xf32>, vector<32x1xf32> -> vector<32x256xf32>
    %cst_38 = arith.constant 0.000000e+00 : f32
    %149 = vector.broadcast %cst_38 : f32 to vector<32x256xf32>
    %150 = vector.shape_cast %32 : vector<1x256xi1> to vector<1x256xi1>
    %151 = vector.broadcast %150 : vector<1x256xi1> to vector<32x256xi1>
    %152 = arith.select %151, %148, %149 : vector<32x256xi1>, vector<32x256xf32>
    %153 = vector.extract_strided_slice %117 {offsets = [0, 15], sizes = [32, 241], strides = [1, 1]} : vector<32x256xf32> to vector<32x241xf32>
    %154 = vector.extract_strided_slice %117 {offsets = [0, 0], sizes = [32, 15], strides = [1, 1]} : vector<32x256xf32> to vector<32x15xf32>
    %155 = tpu.concatenate %153, %154 in 1 : vector<32x241xf32>, vector<32x15xf32> -> vector<32x256xf32>
    %cst_39 = arith.constant 0.000000e+00 : f32
    %156 = vector.broadcast %cst_39 : f32 to vector<32x256xf32>
    %157 = vector.shape_cast %37 : vector<1x256xi1> to vector<1x256xi1>
    %158 = vector.broadcast %157 : vector<1x256xi1> to vector<32x256xi1>
    %159 = arith.select %158, %155, %156 : vector<32x256xi1>, vector<32x256xf32>
    %160 = vector.extract_strided_slice %117 {offsets = [0, 16], sizes = [32, 240], strides = [1, 1]} : vector<32x256xf32> to vector<32x240xf32>
    %161 = vector.extract_strided_slice %117 {offsets = [0, 0], sizes = [32, 16], strides = [1, 1]} : vector<32x256xf32> to vector<32x16xf32>
    %162 = tpu.concatenate %160, %161 in 1 : vector<32x240xf32>, vector<32x16xf32> -> vector<32x256xf32>
    %cst_40 = arith.constant 0.000000e+00 : f32
    %163 = vector.broadcast %cst_40 : f32 to vector<32x256xf32>
    %164 = vector.shape_cast %39 : vector<1x256xi1> to vector<1x256xi1>
    %165 = vector.broadcast %164 : vector<1x256xi1> to vector<32x256xi1>
    %166 = arith.select %165, %162, %163 : vector<32x256xi1>, vector<32x256xf32>
    %167 = vector.extract_strided_slice %117 {offsets = [0, 17], sizes = [32, 239], strides = [1, 1]} : vector<32x256xf32> to vector<32x239xf32>
    %168 = vector.extract_strided_slice %117 {offsets = [0, 0], sizes = [32, 17], strides = [1, 1]} : vector<32x256xf32> to vector<32x17xf32>
    %169 = tpu.concatenate %167, %168 in 1 : vector<32x239xf32>, vector<32x17xf32> -> vector<32x256xf32>
    %cst_41 = arith.constant 0.000000e+00 : f32
    %170 = vector.broadcast %cst_41 : f32 to vector<32x256xf32>
    %171 = vector.shape_cast %44 : vector<1x256xi1> to vector<1x256xi1>
    %172 = vector.broadcast %171 : vector<1x256xi1> to vector<32x256xi1>
    %173 = arith.select %172, %169, %170 : vector<32x256xi1>, vector<32x256xf32>
    %174 = tpu.concatenate %124, %131, %138, %145, %117, %152, %159, %166, %173 in 0 : vector<32x256xf32>, vector<32x256xf32>, vector<32x256xf32>, vector<32x256xf32>, vector<32x256xf32>, vector<32x256xf32>, vector<32x256xf32>, vector<32x256xf32>, vector<32x256xf32> -> vector<288x256xf32>
    %cst_42 = arith.constant dense<0.000000e+00> : vector<16x256xf32>
    %175 = tpu.matmul %45, %174, %cst_42 {dimension_numbers = #tpu.dot_dimension_numbers<[1], [0], [0], [1], [0, 0, 1, 1], [], []>} : vector<16x288xf32>, vector<288x256xf32>, vector<16x256xf32> -> vector<16x256xf32>
    %176 = vector.broadcast %46 : vector<16x1xf32> to vector<16x256xf32>
    %177 = arith.addf %175, %176 : vector<16x256xf32>
    %cst_43 = arith.constant 0.000000e+00 : f32
    %178 = vector.broadcast %cst_43 : f32 to vector<16x256xf32>
    %179 = arith.maximumf %177, %178 : vector<16x256xf32>
    %cst_44 = arith.constant dense<0.000000e+00> : vector<1x256xf32>
    %180 = tpu.matmul %47, %179, %cst_44 {dimension_numbers = #tpu.dot_dimension_numbers<[1], [0], [0], [1], [0, 0, 1, 1], [], []>} : vector<1x16xf32>, vector<16x256xf32>, vector<1x256xf32> -> vector<1x256xf32>
    %181 = vector.broadcast %48 : f32 to vector<1x256xf32>
    %182 = arith.addf %180, %181 : vector<1x256xf32>
    %183 = tpu.concatenate %115, %182 in 0 : vector<1x256xf32>, vector<1x256xf32> -> vector<2x256xf32>
    %c0_45 = arith.constant 0 : index
    %c0_46 = arith.constant 0 : index
    %184 = vector.load %arg7[%c0_45, %c0_46] : memref<2x256xf32, #tpu.memory_space<vmem>>, vector<2x256xf32>
    tpu.vector_store %arg7[%c0_45, %c0_46], %183 {strides = array<i32>} : memref<2x256xf32, #tpu.memory_space<vmem>>, vector<2x256xf32>,
    %185 = arith.negf %183 : vector<2x256xf32>
    %186 = math.exp %185 : vector<2x256xf32>
    %cst_47 = arith.constant 1.000000e+00 : f32
    %187 = vector.broadcast %cst_47 : f32 to vector<2x256xf32>
    %188 = arith.addf %187, %186 : vector<2x256xf32>
    %189 = arith.divf %187, %188 : vector<2x256xf32>
    %c0_48 = arith.constant 0 : index
    %c0_49 = arith.constant 0 : index
    %190 = vector.load %arg6[%c0_48, %c0_49] : memref<256x128xf32, #tpu.memory_space<vmem>>, vector<256x128xf32>
    %cst_50 = arith.constant dense<0.000000e+00> : vector<2x128xf32>
    %191 = tpu.matmul %189, %190, %cst_50 {dimension_numbers = #tpu.dot_dimension_numbers<[1], [0], [0], [1], [0, 0, 1, 1], [], []>} : vector<2x256xf32>, vector<256x128xf32>, vector<2x128xf32> -> vector<2x128xf32>
    %c0_51 = arith.constant 0 : index
    %c0_52 = arith.constant 0 : index
    %192 = vector.load %arg8[%c0_51, %c0_52] : memref<2x128xf32, #tpu.memory_space<vmem>>, vector<2x128xf32>
    tpu.vector_store %arg8[%c0_51, %c0_52], %191 {strides = array<i32>} : memref<2x128xf32, #tpu.memory_space<vmem>>, vector<2x128xf32>,
    return
  }
  func.func @transform_0(%arg0: i32) -> (i32, i32, i32) {
    %c0_i32 = arith.constant 0 : i32
    %c0_i32_0 = arith.constant 0 : i32
    %c0_i32_1 = arith.constant 0 : i32
    return %arg0, %c0_i32, %c0_i32_0 : i32, i32, i32
  }
  func.func @transform_1(%arg0: i32) -> (i32, i32) {
    %c0_i32 = arith.constant 0 : i32
    %c0_i32_0 = arith.constant 0 : i32
    %c0_i32_1 = arith.constant 0 : i32
    return %c0_i32, %c0_i32_0 : i32, i32
  }
  func.func @transform_2(%arg0: i32) -> (i32, i32) {
    %c0_i32 = arith.constant 0 : i32
    %c0_i32_0 = arith.constant 0 : i32
    %c0_i32_1 = arith.constant 0 : i32
    return %c0_i32, %c0_i32_0 : i32, i32
  }
  func.func @transform_3(%arg0: i32) -> (i32, i32) {
    %c0_i32 = arith.constant 0 : i32
    %c0_i32_0 = arith.constant 0 : i32
    %c0_i32_1 = arith.constant 0 : i32
    return %c0_i32, %c0_i32_0 : i32, i32
  }
  func.func @transform_4(%arg0: i32) -> i32 {
    %c0_i32 = arith.constant 0 : i32
    %c0_i32_0 = arith.constant 0 : i32
    return %c0_i32 : i32
  }
  func.func @transform_5(%arg0: i32) -> (i32, i32) {
    %c0_i32 = arith.constant 0 : i32
    %c0_i32_0 = arith.constant 0 : i32
    %c0_i32_1 = arith.constant 0 : i32
    return %c0_i32, %c0_i32_0 : i32, i32
  }
  func.func @transform_6(%arg0: i32) -> (i32, i32) {
    %c0_i32 = arith.constant 0 : i32
    %c0_i32_0 = arith.constant 0 : i32
    return %arg0, %c0_i32 : i32, i32
  }
  func.func @transform_7(%arg0: i32) -> (i32, i32) {
    %c0_i32 = arith.constant 0 : i32
    %c0_i32_0 = arith.constant 0 : i32
    return %arg0, %c0_i32 : i32, i32
  }
}

</mosaic_0001>

<llo_original>
// kernel: tpu_custom_call.1
$region0: #{tpu_custom_call.1}
  #allocation0 [shape = 'u32[]', space=smem, size = 0x4, offset = 0x4, fixed_abs, tag = 'smem constant byte address 0x4 - core index']
  #allocation1 [shape = 'u32[144,128]{1,0:T(1,128)}', space=vmem, size = 0x12000, scoped, tag = 'internal scratch']
  #allocation2 [shape = 'f32[1]{0:T(128)S(6)}', space=smem, size = 0x200, scoped, tag = 'scoped memory for tpu_custom_call.1']
  %s0 = inlined_call_operand.hbm [shape: f32[2,32,256], index: 0, kind: input, shape index: {}]
  %s1 = inlined_call_operand.hbm [shape: f32[16,288], index: 1, kind: input, shape index: {}]
  %s2 = inlined_call_operand.vmem [shape: f32[16,1], index: 2, kind: input, shape index: {}]
  %s3 = inlined_call_operand.vmem [shape: f32[1,16], index: 3, kind: input, shape index: {}]
  %s4 = inlined_call_operand.<no memory space> [shape: f32[1], index: 4, kind: input, shape index: {}]
  %s5 = inlined_call_operand.hbm [shape: f32[256,128], index: 5, kind: input, shape index: {}]
  %s6 = inlined_call_operand.hbm [shape: f32[2,256], index: 6, kind: output, shape index: {0}]
  %s7 = inlined_call_operand.hbm [shape: f32[2,128], index: 7, kind: output, shape index: {1}]
  %8 = xla_tuple %s6, %s7
  %s9 = sld [smem:[#allocation0]]
  $region54: #{tpu_custom_call.1} parent=0
    _
  %s11 = ssub.s32 1, %s9
  %s12 = scalar_select 0, %s11, %s9
  %13 = sst [smem:[#allocation2]] %s4
  $region1: #{tpu_custom_call.1} parent=0
    #allocation3 [shape = 'u8[65536]{0}', space=vmem, size = 0x10000, scoped, tag = 'input window, operand 0, single buffered']
    #allocation4 [shape = 's32[1]{0}', space=sflag, size = 0x4, scoped, tag = 'scoped memory for tpu_custom_call.1']
    #allocation5 [shape = 's32[1]{0}', space=sflag, size = 0x4, scoped, tag = 'scoped memory for tpu_custom_call.1']
    #allocation6 [shape = 'u8[24576]{0}', space=vmem, size = 0x6000, scoped, tag = 'input window, operand 1, single buffered']
    #allocation7 [shape = 's32[1]{0}', space=sflag, size = 0x4, scoped, tag = 'scoped memory for tpu_custom_call.1']
    #allocation8 [shape = 'u8[131072]{0}', space=vmem, size = 0x20000, scoped, tag = 'input window, operand 5, single buffered']
    #allocation9 [shape = 'u8[2048]{0}', space=vmem, size = 0x800, scoped, tag = 'output window, operand 0, single buffered']
    #allocation10 [shape = 'u8[1024]{0}', space=vmem, size = 0x400, scoped, tag = 'output window, operand 1, single buffered']
    #allocation11 [shape = 's32[1]{0}', space=sflag, size = 0x4, scoped, tag = 'scoped memory for tpu_custom_call.1']
    %14 = vsyncpa [#allocation4], 0
    %15 = vsyncpa [#allocation7], 0
    %16 = vsyncpa [#allocation5], 0
    %17 = vsyncpa [#allocation11], 0
    // Predicated region
    $region2: #{tpu_custom_call.1} parent=1 // pred_check
      _
    $region3: #{tpu_custom_call.1} parent=1 // pred_check_branch
      %19 = sbr.rel (0) target = $region5
    $region4: #{tpu_custom_call.1} parent=1 // pred_region
      %s21 = ssub.s32 2048, 2048
      %22 = vsyncadd [#allocation4], %s21
      %s23 = sshll.u32 [#allocation3], 4
      %s24 = int_to_ptr.vmem [resolvable:$true] %s23
      %29 = dma.hbm_to_vmem [thread:$0]  %s0, 2048, %s24, [#allocation4], 256, 256, 16
    $region5: #{tpu_custom_call.1} parent=1 // pred_fallthru
      _
    // Predicated region
    $region6: #{tpu_custom_call.1} parent=1 // pred_check
      _
    $region7: #{tpu_custom_call.1} parent=1 // pred_check_branch
      %31 = sbr.rel (0) target = $region9
    $region8: #{tpu_custom_call.1} parent=1 // pred_region
      %s33 = ssub.s32 768, 768
      %34 = vsyncadd [#allocation7], %s33
      %s35 = sshll.u32 [#allocation6], 4
      %s36 = int_to_ptr.vmem [resolvable:$true] %s35
      %41 = dma.hbm_to_vmem [thread:$0]  %s1, 768, %s36, [#allocation7], 384, 384, 24
    $region9: #{tpu_custom_call.1} parent=1 // pred_fallthru
      _
    // Predicated region
    $region10: #{tpu_custom_call.1} parent=1 // pred_check
      _
    $region11: #{tpu_custom_call.1} parent=1 // pred_check_branch
      %43 = sbr.rel (0) target = $region13
    $region12: #{tpu_custom_call.1} parent=1 // pred_region
      _
    $region13: #{tpu_custom_call.1} parent=1 // pred_fallthru
      _
    // Predicated region
    $region14: #{tpu_custom_call.1} parent=1 // pred_check
      _
    $region15: #{tpu_custom_call.1} parent=1 // pred_check_branch
      %45 = sbr.rel (0) target = $region17
    $region16: #{tpu_custom_call.1} parent=1 // pred_region
      _
    $region17: #{tpu_custom_call.1} parent=1 // pred_fallthru
      _
    // Predicated region
    $region18: #{tpu_custom_call.1} parent=1 // pred_check
      _
    $region19: #{tpu_custom_call.1} parent=1 // pred_check_branch
      %47 = sbr.rel (0) target = $region21
    $region20: #{tpu_custom_call.1} parent=1 // pred_region
      _
    $region21: #{tpu_custom_call.1} parent=1 // pred_fallthru
      _
    // Predicated region
    $region22: #{tpu_custom_call.1} parent=1 // pred_check
      _
    $region23: #{tpu_custom_call.1} parent=1 // pred_check_branch
      %49 = sbr.rel (0) target = $region25
    $region24: #{tpu_custom_call.1} parent=1 // pred_region
      %s51 = ssub.s32 4096, 4096
      %52 = vsyncadd [#allocation7], %s51
      %s53 = sshll.u32 [#allocation8], 4
      %s54 = int_to_ptr.vmem [resolvable:$true] %s53
      %59 = dma.hbm_to_vmem [thread:$0]  %s5, 4096, %s54, [#allocation7], 128, 128, 8
    $region25: #{tpu_custom_call.1} parent=1 // pred_fallthru
      _
    // Predicated region
    $region26: #{tpu_custom_call.1} parent=1 // pred_check
      _
    $region27: #{tpu_custom_call.1} parent=1 // pred_check_branch
      %61 = sbr.rel (0) target = $region29
    $region28: #{tpu_custom_call.1} parent=1 // pred_region
      %62 = dma.done [#allocation4], 2048
    $region29: #{tpu_custom_call.1} parent=1 // pred_fallthru
      _
    // Predicated region
    $region30: #{tpu_custom_call.1} parent=1 // pred_check
      _
    $region31: #{tpu_custom_call.1} parent=1 // pred_check_branch
      %64 = sbr.rel (0) target = $region33
    $region32: #{tpu_custom_call.1} parent=1 // pred_region
      %65 = dma.done [#allocation7], 768
    $region33: #{tpu_custom_call.1} parent=1 // pred_fallthru
      _
    // Predicated region
    $region34: #{tpu_custom_call.1} parent=1 // pred_check
      _
    $region35: #{tpu_custom_call.1} parent=1 // pred_check_branch
      %67 = sbr.rel (0) target = $region37
    $region36: #{tpu_custom_call.1} parent=1 // pred_region
      %68 = dma.done [#allocation7], 4096
    $region37: #{tpu_custom_call.1} parent=1 // pred_fallthru
      _
    %v69 = vlaneseq
    %v70 = vand.u32 %v69, 127
    %v71 = vadd.s32 %v70, 128
    %vm72 = vcmp.lt.s32.totalorder %v70, 0
    %v73 = vsub.s32 0, %v70
    %v74 = vsel %vm72, %v73, %v70
    %v75 = vshrl.u32 %v74, 4
    %v76 = vand.u32 %v74, 15
    %v77 = vsub.s32 0, %v76
    %v78 = vsel %vm72, %v77, %v76
    %vm79 = vcmp.lt.s32.totalorder %v71, 0
    %v80 = vsub.s32 0, %v71
    %v81 = vsel %vm79, %v80, %v71
    %v82 = vshrl.u32 %v81, 4
    %v83 = vand.u32 %v81, 15
    %v84 = vsub.s32 0, %v83
    %v85 = vsel %vm79, %v84, %v83
    %vm86 = vcmp.ne.s32.totalorder %v78, 0
    %vm87 = vcmp.ne.s32.totalorder %v85, 0
    %vm88 = vcmp.lt.s32.totalorder %v78, 0
    %vm89 = vcmp.lt.s32.totalorder %v85, 0
    %vm90 = vmand %vm88, %vm86
    %vm91 = vmand %vm89, %vm87
    %v92 = vadd.s32 %v78, 16
    %v93 = vadd.s32 %v85, 16
    %v94 = vsel %vm90, %v92, %v78
    %v95 = vsel %vm91, %v93, %v85
    %vm96 = vcmp.ne.s32.totalorder %v94, 0
    %vm97 = vcmp.ne.s32.totalorder %v95, 0
    %vm98 = vcmp.ge.s32.totalorder %v70, 16
    %vm99 = vcmp.ge.s32.totalorder %v71, 16
    %vm100 = vmand %vm96, %vm98
    %vm101 = vmand %vm97, %vm99
    %vm102 = vcmp.ne.s32.totalorder %v94, 15
    %vm103 = vcmp.ne.s32.totalorder %v95, 15
    %vm104 = vmand %vm102, %vm98
    %vm105 = vmand %vm103, %vm99
    %vm106 = vcmp.lt.s32.totalorder %v70, 240
    %vm107 = vcmp.lt.s32.totalorder %v71, 240
    %vm108 = vmand %vm96, %vm106
    %vm109 = vmand %vm97, %vm107
    %vm110 = vmand %vm102, %vm106
    %vm111 = vmand %vm103, %vm107
    %v112 = vld [vmem:[#allocation6] sm:$0xff]
    %v113 = vld [vmem:[#allocation6 + $0x8] sm:$0xff]
    %v114 = vld [vmem:[#allocation6 + $0x10] sm:$0xff]
    %v115 = vld [vmem:[#allocation6 + $0x18] sm:$0xff]
    %v116 = vld [vmem:[#allocation6 + $0x20] sm:$0xff]
    %v117 = vld [vmem:[#allocation6 + $0x28] sm:$0xff]
    %v118 = vld [vmem:[%s2] sm:$0xff]
    %v119 = vld [vmem:[%s2 + $0x8] sm:$0xff]
    %v120 = vld [vmem:[%s3] sm:$0x1]
    %s121 = sld [smem:[#allocation2]]
    %v122 = vld [vmem:[#allocation3] sm:$0xff]
    %v123 = vld [vmem:[#allocation3 + $0x8] sm:$0xff]
    %v124 = vld [vmem:[#allocation3 + $0x10] sm:$0xff]
    %v125 = vld [vmem:[#allocation3 + $0x18] sm:$0xff]
    %v126 = vld [vmem:[#allocation3 + $0x20] sm:$0xff]
    %v127 = vld [vmem:[#allocation3 + $0x28] sm:$0xff]
    %v128 = vld [vmem:[#allocation3 + $0x30] sm:$0xff]
    %v129 = vld [vmem:[#allocation3 + $0x38] sm:$0xff]
    %134 = vrot.lane.b32.xlu0 %v123, 17
    %v135 = vpop.permute.xlu0 %134
    %136 = vrot.lane.b32.xlu0 %v125, 17
    %v137 = vpop.permute.xlu0 %136
    %138 = vrot.lane.b32.xlu0 %v127, 17
    %v139 = vpop.permute.xlu0 %138
    %140 = vrot.lane.b32.xlu0 %v129, 17
    %v141 = vpop.permute.xlu0 %140
    %150 = vrot.lane.b32.xlu0 %v122, 17
    %v151 = vpop.permute.xlu0 %150
    %152 = vrot.lane.b32.xlu0 %v124, 17
    %v153 = vpop.permute.xlu0 %152
    %154 = vrot.lane.b32.xlu0 %v126, 17
    %v155 = vpop.permute.xlu0 %154
    %156 = vrot.lane.b32.xlu0 %v128, 17
    %v157 = vpop.permute.xlu0 %156
    %vm158 = vcmask 138240
    %v159 = vsel %vm158, %v151, %v135
    %v160 = vsel %vm158, %v153, %v137
    %v161 = vsel %vm158, %v155, %v139
    %v162 = vsel %vm158, %v157, %v141
    %v171 = vsel %vm158, %v135, %v151
    %v172 = vsel %vm158, %v137, %v153
    %v173 = vsel %vm158, %v139, %v155
    %v174 = vsel %vm158, %v141, %v157
    %v175 = vsel %vm100, 1, 0
    %v176 = vsel %vm101, 1, 0
    %vm177 = vcmp.eq.s32.totalorder %v175, 1
    %vm178 = vcmp.eq.s32.totalorder %v176, 1
    %v179 = vsel %vm177, %v171, 0.0
    %v180 = vsel %vm178, %v159, 0.0
    %v181 = vsel %vm177, %v172, 0.0
    %v182 = vsel %vm178, %v160, 0.0
    %v183 = vsel %vm177, %v173, 0.0
    %v184 = vsel %vm178, %v161, 0.0
    %v185 = vsel %vm177, %v174, 0.0
    %v186 = vsel %vm178, %v162, 0.0
    %187 = vrot.lane.b32.xlu0 %v123, 16
    %v188 = vpop.permute.xlu0 %187
    %189 = vrot.lane.b32.xlu0 %v125, 16
    %v190 = vpop.permute.xlu0 %189
    %191 = vrot.lane.b32.xlu0 %v127, 16
    %v192 = vpop.permute.xlu0 %191
    %193 = vrot.lane.b32.xlu0 %v129, 16
    %v194 = vpop.permute.xlu0 %193
    %199 = vrot.lane.b32.xlu0 %v122, 16
    %v200 = vpop.permute.xlu0 %199
    %201 = vrot.lane.b32.xlu0 %v124, 16
    %v202 = vpop.permute.xlu0 %201
    %203 = vrot.lane.b32.xlu0 %v126, 16
    %v204 = vpop.permute.xlu0 %203
    %205 = vrot.lane.b32.xlu0 %v128, 16
    %v206 = vpop.permute.xlu0 %205
    %vm207 = vcmask 130048
    %v208 = vsel %vm207, %v200, %v188
    %v209 = vsel %vm207, %v202, %v190
    %v210 = vsel %vm207, %v204, %v192
    %v211 = vsel %vm207, %v206, %v194
    %v220 = vsel %vm207, %v188, %v200
    %v221 = vsel %vm207, %v190, %v202
    %v222 = vsel %vm207, %v192, %v204
    %v223 = vsel %vm207, %v194, %v206
    %v224 = vsel %vm98, 1, 0
    %v225 = vsel %vm99, 1, 0
    %vm226 = vcmp.eq.s32.totalorder %v224, 1
    %vm227 = vcmp.eq.s32.totalorder %v225, 1
    %v228 = vsel %vm226, %v220, 0.0
    %v229 = vsel %vm227, %v208, 0.0
    %v230 = vsel %vm226, %v221, 0.0
    %v231 = vsel %vm227, %v209, 0.0
    %v232 = vsel %vm226, %v222, 0.0
    %v233 = vsel %vm227, %v210, 0.0
    %v234 = vsel %vm226, %v223, 0.0
    %v235 = vsel %vm227, %v211, 0.0
    %236 = vrot.lane.b32.xlu0 %v123, 15
    %v237 = vpop.permute.xlu0 %236
    %238 = vrot.lane.b32.xlu0 %v125, 15
    %v239 = vpop.permute.xlu0 %238
    %240 = vrot.lane.b32.xlu0 %v127, 15
    %v241 = vpop.permute.xlu0 %240
    %242 = vrot.lane.b32.xlu0 %v129, 15
    %v243 = vpop.permute.xlu0 %242
    %248 = vrot.lane.b32.xlu0 %v122, 15
    %v249 = vpop.permute.xlu0 %248
    %250 = vrot.lane.b32.xlu0 %v124, 15
    %v251 = vpop.permute.xlu0 %250
    %252 = vrot.lane.b32.xlu0 %v126, 15
    %v253 = vpop.permute.xlu0 %252
    %254 = vrot.lane.b32.xlu0 %v128, 15
    %v255 = vpop.permute.xlu0 %254
    %vm256 = vcmask 121856
    %v257 = vsel %vm256, %v249, %v237
    %v258 = vsel %vm256, %v251, %v239
    %v259 = vsel %vm256, %v253, %v241
    %v260 = vsel %vm256, %v255, %v243
    %v269 = vsel %vm256, %v237, %v249
    %v270 = vsel %vm256, %v239, %v251
    %v271 = vsel %vm256, %v241, %v253
    %v272 = vsel %vm256, %v243, %v255
    %v273 = vsel %vm104, 1, 0
    %v274 = vsel %vm105, 1, 0
    %vm275 = vcmp.eq.s32.totalorder %v273, 1
    %vm276 = vcmp.eq.s32.totalorder %v274, 1
    %v277 = vsel %vm275, %v269, 0.0
    %v278 = vsel %vm276, %v257, 0.0
    %v279 = vsel %vm275, %v270, 0.0
    %v280 = vsel %vm276, %v258, 0.0
    %v281 = vsel %vm275, %v271, 0.0
    %v282 = vsel %vm276, %v259, 0.0
    %v283 = vsel %vm275, %v272, 0.0
    %v284 = vsel %vm276, %v260, 0.0
    %285 = vrot.lane.b32.xlu0 %v123, 1
    %v286 = vpop.permute.xlu0 %285
    %287 = vrot.lane.b32.xlu0 %v125, 1
    %v288 = vpop.permute.xlu0 %287
    %289 = vrot.lane.b32.xlu0 %v127, 1
    %v290 = vpop.permute.xlu0 %289
    %291 = vrot.lane.b32.xlu0 %v129, 1
    %v292 = vpop.permute.xlu0 %291
    %297 = vrot.lane.b32.xlu0 %v122, 1
    %v298 = vpop.permute.xlu0 %297
    %299 = vrot.lane.b32.xlu0 %v124, 1
    %v300 = vpop.permute.xlu0 %299
    %301 = vrot.lane.b32.xlu0 %v126, 1
    %v302 = vpop.permute.xlu0 %301
    %303 = vrot.lane.b32.xlu0 %v128, 1
    %v304 = vpop.permute.xlu0 %303
    %vm305 = vcmask 7168
    %v306 = vsel %vm305, %v298, %v286
    %v307 = vsel %vm305, %v300, %v288
    %v308 = vsel %vm305, %v302, %v290
    %v309 = vsel %vm305, %v304, %v292
    %v318 = vsel %vm305, %v286, %v298
    %v319 = vsel %vm305, %v288, %v300
    %v320 = vsel %vm305, %v290, %v302
    %v321 = vsel %vm305, %v292, %v304
    %v322 = vsel %vm96, 1, 0
    %v323 = vsel %vm97, 1, 0
    %vm324 = vcmp.eq.s32.totalorder %v322, 1
    %vm325 = vcmp.eq.s32.totalorder %v323, 1
    %v326 = vsel %vm324, %v318, 0.0
    %v327 = vsel %vm325, %v306, 0.0
    %v328 = vsel %vm324, %v319, 0.0
    %v329 = vsel %vm325, %v307, 0.0
    %v330 = vsel %vm324, %v320, 0.0
    %v331 = vsel %vm325, %v308, 0.0
    %v332 = vsel %vm324, %v321, 0.0
    %v333 = vsel %vm325, %v309, 0.0
    %334 = vrot.lane.b32.xlu0 %v122, 127
    %v335 = vpop.permute.xlu0 %334
    %336 = vrot.lane.b32.xlu0 %v123, 127
    %v337 = vpop.permute.xlu0 %336
    %338 = vrot.lane.b32.xlu0 %v124, 127
    %v339 = vpop.permute.xlu0 %338
    %340 = vrot.lane.b32.xlu0 %v125, 127
    %v341 = vpop.permute.xlu0 %340
    %342 = vrot.lane.b32.xlu0 %v126, 127
    %v343 = vpop.permute.xlu0 %342
    %344 = vrot.lane.b32.xlu0 %v127, 127
    %v345 = vpop.permute.xlu0 %344
    %346 = vrot.lane.b32.xlu0 %v128, 127
    %v347 = vpop.permute.xlu0 %346
    %348 = vrot.lane.b32.xlu0 %v129, 127
    %v349 = vpop.permute.xlu0 %348
    %vm350 = vcmask 1039360
    %v351 = vsel %vm350, %v335, %v337
    %v352 = vsel %vm350, %v339, %v341
    %v353 = vsel %vm350, %v343, %v345
    %v354 = vsel %vm350, %v347, %v349
    %v367 = vsel %vm350, %v337, %v335
    %v368 = vsel %vm350, %v341, %v339
    %v369 = vsel %vm350, %v345, %v343
    %v370 = vsel %vm350, %v349, %v347
    %v371 = vsel %vm102, 1, 0
    %v372 = vsel %vm103, 1, 0
    %vm373 = vcmp.eq.s32.totalorder %v371, 1
    %vm374 = vcmp.eq.s32.totalorder %v372, 1
    %v375 = vsel %vm373, %v351, 0.0
    %v376 = vsel %vm374, %v367, 0.0
    %v377 = vsel %vm373, %v352, 0.0
    %v378 = vsel %vm374, %v368, 0.0
    %v379 = vsel %vm373, %v353, 0.0
    %v380 = vsel %vm374, %v369, 0.0
    %v381 = vsel %vm373, %v354, 0.0
    %v382 = vsel %vm374, %v370, 0.0
    %383 = vrot.lane.b32.xlu0 %v122, 113
    %v384 = vpop.permute.xlu0 %383
    %385 = vrot.lane.b32.xlu0 %v123, 113
    %v386 = vpop.permute.xlu0 %385
    %387 = vrot.lane.b32.xlu0 %v124, 113
    %v388 = vpop.permute.xlu0 %387
    %389 = vrot.lane.b32.xlu0 %v125, 113
    %v390 = vpop.permute.xlu0 %389
    %391 = vrot.lane.b32.xlu0 %v126, 113
    %v392 = vpop.permute.xlu0 %391
    %393 = vrot.lane.b32.xlu0 %v127, 113
    %v394 = vpop.permute.xlu0 %393
    %395 = vrot.lane.b32.xlu0 %v128, 113
    %v396 = vpop.permute.xlu0 %395
    %397 = vrot.lane.b32.xlu0 %v129, 113
    %v398 = vpop.permute.xlu0 %397
    %vm399 = vcmask 924672
    %v400 = vsel %vm399, %v384, %v386
    %v401 = vsel %vm399, %v388, %v390
    %v402 = vsel %vm399, %v392, %v394
    %v403 = vsel %vm399, %v396, %v398
    %v416 = vsel %vm399, %v386, %v384
    %v417 = vsel %vm399, %v390, %v388
    %v418 = vsel %vm399, %v394, %v392
    %v419 = vsel %vm399, %v398, %v396
    %v420 = vsel %vm108, 1, 0
    %v421 = vsel %vm109, 1, 0
    %vm422 = vcmp.eq.s32.totalorder %v420, 1
    %vm423 = vcmp.eq.s32.totalorder %v421, 1
    %v424 = vsel %vm422, %v400, 0.0
    %v425 = vsel %vm423, %v416, 0.0
    %v426 = vsel %vm422, %v401, 0.0
    %v427 = vsel %vm423, %v417, 0.0
    %v428 = vsel %vm422, %v402, 0.0
    %v429 = vsel %vm423, %v418, 0.0
    %v430 = vsel %vm422, %v403, 0.0
    %v431 = vsel %vm423, %v419, 0.0
    %432 = vrot.lane.b32.xlu0 %v122, 112
    %v433 = vpop.permute.xlu0 %432
    %434 = vrot.lane.b32.xlu0 %v123, 112
    %v435 = vpop.permute.xlu0 %434
    %436 = vrot.lane.b32.xlu0 %v124, 112
    %v437 = vpop.permute.xlu0 %436
    %438 = vrot.lane.b32.xlu0 %v125, 112
    %v439 = vpop.permute.xlu0 %438
    %440 = vrot.lane.b32.xlu0 %v126, 112
    %v441 = vpop.permute.xlu0 %440
    %442 = vrot.lane.b32.xlu0 %v127, 112
    %v443 = vpop.permute.xlu0 %442
    %444 = vrot.lane.b32.xlu0 %v128, 112
    %v445 = vpop.permute.xlu0 %444
    %446 = vrot.lane.b32.xlu0 %v129, 112
    %v447 = vpop.permute.xlu0 %446
    %vm448 = vcmask 916480
    %v449 = vsel %vm448, %v433, %v435
    %v450 = vsel %vm448, %v437, %v439
    %v451 = vsel %vm448, %v441, %v443
    %v452 = vsel %vm448, %v445, %v447
    %v465 = vsel %vm448, %v435, %v433
    %v466 = vsel %vm448, %v439, %v437
    %v467 = vsel %vm448, %v443, %v441
    %v468 = vsel %vm448, %v447, %v445
    %v469 = vsel %vm106, 1, 0
    %v470 = vsel %vm107, 1, 0
    %vm471 = vcmp.eq.s32.totalorder %v469, 1
    %vm472 = vcmp.eq.s32.totalorder %v470, 1
    %v473 = vsel %vm471, %v449, 0.0
    %v474 = vsel %vm472, %v465, 0.0
    %v475 = vsel %vm471, %v450, 0.0
    %v476 = vsel %vm472, %v466, 0.0
    %v477 = vsel %vm471, %v451, 0.0
    %v478 = vsel %vm472, %v467, 0.0
    %v479 = vsel %vm471, %v452, 0.0
    %v480 = vsel %vm472, %v468, 0.0
    %481 = vrot.lane.b32.xlu0 %v122, 111
    %v482 = vpop.permute.xlu0 %481
    %483 = vrot.lane.b32.xlu0 %v123, 111
    %v484 = vpop.permute.xlu0 %483
    %485 = vrot.lane.b32.xlu0 %v124, 111
    %v486 = vpop.permute.xlu0 %485
    %487 = vrot.lane.b32.xlu0 %v125, 111
    %v488 = vpop.permute.xlu0 %487
    %489 = vrot.lane.b32.xlu0 %v126, 111
    %v490 = vpop.permute.xlu0 %489
    %491 = vrot.lane.b32.xlu0 %v127, 111
    %v492 = vpop.permute.xlu0 %491
    %493 = vrot.lane.b32.xlu0 %v128, 111
    %v494 = vpop.permute.xlu0 %493
    %495 = vrot.lane.b32.xlu0 %v129, 111
    %v496 = vpop.permute.xlu0 %495
    %vm497 = vcmask 908288
    %v498 = vsel %vm497, %v482, %v484
    %v499 = vsel %vm497, %v486, %v488
    %v500 = vsel %vm497, %v490, %v492
    %v501 = vsel %vm497, %v494, %v496
    %v514 = vsel %vm497, %v484, %v482
    %v515 = vsel %vm497, %v488, %v486
    %v516 = vsel %vm497, %v492, %v490
    %v517 = vsel %vm497, %v496, %v494
    %v518 = vsel %vm110, 1, 0
    %v519 = vsel %vm111, 1, 0
    %vm520 = vcmp.eq.s32.totalorder %v518, 1
    %vm521 = vcmp.eq.s32.totalorder %v519, 1
    %v522 = vsel %vm520, %v498, 0.0
    %v523 = vsel %vm521, %v514, 0.0
    %v524 = vsel %vm520, %v499, 0.0
    %v525 = vsel %vm521, %v515, 0.0
    %v526 = vsel %vm520, %v500, 0.0
    %v527 = vsel %vm521, %v516, 0.0
    %v528 = vsel %vm520, %v501, 0.0
    %v529 = vsel %vm521, %v517, 0.0
    %531 = vset.pattern.permute.xlu0 0
    %532 = vperm.xlu0 %531, %v118
    %v533 = vpop.permute.xlu0 %532
    %536 = vset.pattern.permute.xlu0 0
    %537 = vperm.xlu0 %536, %v119
    %v538 = vpop.permute.xlu0 %537
    %vm540 = vcmask 261120
    %v542 = vsel %vm540, %v114, 0
    %v545 = vsel %vm540, %v117, 0
    %547 = vmatprep.subr.mxu0 %v180
    %548 = vmatpush1.msra.mxu0 %v179
    %549 = vmatprep.subr.mxu0 %v182
    %550 = vmatpush1.msra.mxu0 %v181
    %551 = vmatprep.subr.mxu0 %v184
    %552 = vmatpush1.msra.mxu0 %v183
    %553 = vmatprep.subr.mxu0 %v186
    %554 = vmatpush1.msra.mxu0 %v185
    %555 = vmatprep.subr.mxu0 %v229
    %556 = vmatpush1.msra.mxu0 %v228
    %557 = vmatprep.subr.mxu0 %v231
    %558 = vmatpush1.msra.mxu0 %v230
    %559 = vmatprep.subr.mxu0 %v233
    %560 = vmatpush1.msra.mxu0 %v232
    %561 = vmatprep.subr.mxu0 %v235
    %562 = vmatpush1.msra.mxu0 %v234
    %563 = vmatprep.subr.mxu0 %v278
    %564 = vmatpush1.msra.mxu0 %v277
    %565 = vmatprep.subr.mxu0 %v280
    %566 = vmatpush1.msra.mxu0 %v279
    %567 = vmatprep.subr.mxu0 %v282
    %568 = vmatpush1.msra.mxu0 %v281
    %569 = vmatprep.subr.mxu0 %v284
    %570 = vmatpush1.msra.mxu0 %v283
    %571 = vmatprep.subr.mxu0 %v327
    %572 = vmatpush1.msra.mxu0 %v326
    %573 = vmatprep.subr.mxu0 %v329
    %574 = vmatpush1.msra.mxu0 %v328
    %575 = vmatprep.subr.mxu0 %v331
    %576 = vmatpush1.msra.mxu0 %v330
    %577 = vmatprep.subr.mxu0 %v333
    %578 = vmatpush1.msra.mxu0 %v332
    %579 = vmatprep.subr.mxu0 %v123
    %580 = vmatpush1.msra.mxu0 %v122
    %581 = vmatprep.subr.mxu0 %v125
    %582 = vmatpush1.msra.mxu0 %v124
    %583 = vmatprep.subr.mxu0 %v127
    %584 = vmatpush1.msra.mxu0 %v126
    %585 = vmatprep.subr.mxu0 %v129
    %586 = vmatpush1.msra.mxu0 %v128
    %587 = vmatprep.subr.mxu0 %v376
    %588 = vmatpush1.msra.mxu0 %v375
    %589 = vmatprep.subr.mxu0 %v378
    %590 = vmatpush1.msra.mxu0 %v377
    %591 = vmatprep.subr.mxu0 %v380
    %592 = vmatpush1.msra.mxu0 %v379
    %593 = vmatprep.subr.mxu0 %v382
    %594 = vmatpush1.msra.mxu0 %v381
    %595 = vmatprep.subr.mxu0 %v425
    %596 = vmatpush1.msra.mxu0 %v424
    %597 = vmatprep.subr.mxu0 %v427
    %598 = vmatpush1.msra.mxu0 %v426
    %599 = vmatprep.subr.mxu0 %v429
    %600 = vmatpush1.msra.mxu0 %v428
    %601 = vmatprep.subr.mxu0 %v431
    %602 = vmatpush1.msra.mxu0 %v430
    %603 = vmatprep.subr.mxu0 %v474
    %604 = vmatpush1.msra.mxu0 %v473
    %605 = vmatprep.subr.mxu0 %v476
    %606 = vmatpush1.msra.mxu0 %v475
    %607 = vmatprep.subr.mxu0 %v478
    %608 = vmatpush1.msra.mxu0 %v477
    %609 = vmatprep.subr.mxu0 %v480
    %610 = vmatpush1.msra.mxu0 %v479
    %611 = vmatprep.mubr.f32.mxu0 %v113
    %612 = vmatmul.mubr.f32.gmra.mrb[0].mxu0 %v112
    %v613 = vpop.f32.mrb[0].mxu0
    %v614 = vadd.f32 %v533, %v613
    %v615 = vpop.f32.mrb[0].mxu0
    %v616 = vadd.f32 %v533, %v615
    %617 = vmatprep.mubr.f32.mxu0 %v116
    %618 = vmatmul.mubr.f32.gmra.mrb[0].mxu0 %v115
    %v619 = vpop.f32.mrb[0].mxu0
    %v620 = vadd.f32 %v538, %v619
    %v621 = vpop.f32.mrb[0].mxu0
    %v622 = vadd.f32 %v538, %v621
    %623 = vdwg.mxu0
    %624 = vmatprep.subr.mxu0 %v523
    %625 = vmatpush1.msra.mxu0 %v522
    %626 = vmatprep.subr.mxu0 %v525
    %627 = vmatpush1.msra.mxu0 %v524
    %628 = vmatprep.subr.mxu0 %v527
    %629 = vmatpush1.msra.mxu0 %v526
    %630 = vmatprep.subr.mxu0 %v529
    %631 = vmatpush1.msra.mxu0 %v528
    %632 = vmatprep.subr.mxu0 0.0
    %633 = vmatpush1.msra.mxu0 0.0
    %634 = vmatprep.subr.mxu0 0.0
    %635 = vmatpush1.msra.mxu0 0.0
    %636 = vmatprep.subr.mxu0 0.0
    %637 = vmatpush1.msra.mxu0 0.0
    %638 = vmatprep.subr.mxu0 0.0
    %639 = vmatpush1.msra.mxu0 0.0
    %640 = vmatprep.subr.mxu0 0.0
    %641 = vmatpush1.msra.mxu0 0.0
    %642 = vmatprep.subr.mxu0 0.0
    %643 = vmatpush1.msra.mxu0 0.0
    %644 = vmatprep.subr.mxu0 0.0
    %645 = vmatpush1.msra.mxu0 0.0
    %646 = vmatprep.subr.mxu0 0.0
    %647 = vmatpush1.msra.mxu0 0.0
    %648 = vmatprep.subr.mxu0 0.0
    %649 = vmatpush1.msra.mxu0 0.0
    %650 = vmatprep.subr.mxu0 0.0
    %651 = vmatpush1.msra.mxu0 0.0
    %652 = vmatprep.subr.mxu0 0.0
    %653 = vmatpush1.msra.mxu0 0.0
    %654 = vmatprep.subr.mxu0 0.0
    %655 = vmatpush1.msra.mxu0 0.0
    %656 = vmatprep.subr.mxu0 0.0
    %657 = vmatpush1.msra.mxu0 0.0
    %658 = vmatprep.subr.mxu0 0.0
    %659 = vmatpush1.msra.mxu0 0.0
    %660 = vmatprep.subr.mxu0 0.0
    %661 = vmatpush1.msra.mxu0 0.0
    %662 = vmatprep.subr.mxu0 0.0
    %663 = vmatpush1.msra.mxu0 0.0
    %664 = vmatprep.subr.mxu0 0.0
    %665 = vmatpush1.msra.mxu0 0.0
    %666 = vmatprep.subr.mxu0 0.0
    %667 = vmatpush1.msra.mxu0 0.0
    %668 = vmatprep.subr.mxu0 0.0
    %669 = vmatpush1.msra.mxu0 0.0
    %670 = vmatprep.subr.mxu0 0.0
    %671 = vmatpush1.msra.mxu0 0.0
    %672 = vmatprep.subr.mxu0 0.0
    %673 = vmatpush1.msra.mxu0 0.0
    %674 = vmatprep.subr.mxu0 0.0
    %675 = vmatpush1.msra.mxu0 0.0
    %676 = vmatprep.subr.mxu0 0.0
    %677 = vmatpush1.msra.mxu0 0.0
    %678 = vmatprep.subr.mxu0 0.0
    %679 = vmatpush1.msra.mxu0 0.0
    %680 = vmatprep.subr.mxu0 0.0
    %681 = vmatpush1.msra.mxu0 0.0
    %682 = vmatprep.subr.mxu0 0.0
    %683 = vmatpush1.msra.mxu0 0.0
    %684 = vmatprep.subr.mxu0 0.0
    %685 = vmatpush1.msra.mxu0 0.0
    %686 = vmatprep.subr.mxu0 0.0
    %687 = vmatpush1.msra.mxu0 0.0
    %688 = vmatprep.mubr.f32.mxu0 0.0
    %689 = vmatmul.mubr.f32.gmra.mrb[0].mxu0 %v542
    %v690 = vpop.f32.mrb[0].mxu0
    %v691 = vadd.f32 %v614, %v690
    %v692 = vpop.f32.mrb[0].mxu0
    %v693 = vadd.f32 %v616, %v692
    %694 = vmatprep.mubr.f32.mxu0 0.0
    %695 = vmatmul.mubr.f32.gmra.mrb[0].mxu0 %v545
    %v696 = vpop.f32.mrb[0].mxu0
    %v697 = vadd.f32 %v620, %v696
    %v698 = vpop.f32.mrb[0].mxu0
    %v699 = vadd.f32 %v622, %v698
    %700 = vdwg.mxu0
    %v701 = vmax.f32 %v691, 0.0
    %v702 = vmax.f32 %v693, 0.0
    %v703 = vmax.f32 %v697, 0.0
    %v704 = vmax.f32 %v699, 0.0
    %v705 = vstv %s121
    %v707 = vsel %vm207, %v120, 0
    %709 = vmatprep.subr.mxu0 %v702
    %710 = vmatpush1.msra.mxu0 %v701
    %711 = vmatprep.subr.mxu0 %v704
    %712 = vmatpush1.msra.mxu0 %v703
    %713 = vmatprep.subr.mxu0 0.0
    %714 = vmatpush1.msra.mxu0 0.0
    %715 = vmatprep.subr.mxu0 0.0
    %716 = vmatpush1.msra.mxu0 0.0
    %717 = vmatprep.subr.mxu0 0.0
    %718 = vmatpush1.msra.mxu0 0.0
    %719 = vmatprep.subr.mxu0 0.0
    %720 = vmatpush1.msra.mxu0 0.0
    %721 = vmatprep.subr.mxu0 0.0
    %722 = vmatpush1.msra.mxu0 0.0
    %723 = vmatprep.subr.mxu0 0.0
    %724 = vmatpush1.msra.mxu0 0.0
    %725 = vmatprep.subr.mxu0 0.0
    %726 = vmatpush1.msra.mxu0 0.0
    %727 = vmatprep.subr.mxu0 0.0
    %728 = vmatpush1.msra.mxu0 0.0
    %729 = vmatprep.subr.mxu0 0.0
    %730 = vmatpush1.msra.mxu0 0.0
    %731 = vmatprep.subr.mxu0 0.0
    %732 = vmatpush1.msra.mxu0 0.0
    %733 = vmatprep.subr.mxu0 0.0
    %734 = vmatpush1.msra.mxu0 0.0
    %735 = vmatprep.subr.mxu0 0.0
    %736 = vmatpush1.msra.mxu0 0.0
    %737 = vmatprep.subr.mxu0 0.0
    %738 = vmatpush1.msra.mxu0 0.0
    %739 = vmatprep.subr.mxu0 0.0
    %740 = vmatpush1.msra.mxu0 0.0
    %741 = vmatprep.subr.mxu0 0.0
    %742 = vmatpush1.msra.mxu0 0.0
    %743 = vmatprep.subr.mxu0 0.0
    %744 = vmatpush1.msra.mxu0 0.0
    %745 = vmatprep.subr.mxu0 0.0
    %746 = vmatpush1.msra.mxu0 0.0
    %747 = vmatprep.subr.mxu0 0.0
    %748 = vmatpush1.msra.mxu0 0.0
    %749 = vmatprep.subr.mxu0 0.0
    %750 = vmatpush1.msra.mxu0 0.0
    %751 = vmatprep.subr.mxu0 0.0
    %752 = vmatpush1.msra.mxu0 0.0
    %753 = vmatprep.subr.mxu0 0.0
    %754 = vmatpush1.msra.mxu0 0.0
    %755 = vmatprep.subr.mxu0 0.0
    %756 = vmatpush1.msra.mxu0 0.0
    %757 = vmatprep.subr.mxu0 0.0
    %758 = vmatpush1.msra.mxu0 0.0
    %759 = vmatprep.subr.mxu0 0.0
    %760 = vmatpush1.msra.mxu0 0.0
    %761 = vmatprep.subr.mxu0 0.0
    %762 = vmatpush1.msra.mxu0 0.0
    %763 = vmatprep.subr.mxu0 0.0
    %764 = vmatpush1.msra.mxu0 0.0
    %765 = vmatprep.subr.mxu0 0.0
    %766 = vmatpush1.msra.mxu0 0.0
    %767 = vmatprep.subr.mxu0 0.0
    %768 = vmatpush1.msra.mxu0 0.0
    %769 = vmatprep.subr.mxu0 0.0
    %770 = vmatpush1.msra.mxu0 0.0
    %771 = vmatprep.subr.mxu0 0.0
    %772 = vmatpush1.msra.mxu0 0.0
    %773 = vmatprep.mubr.f32.mxu0 0.0
    %774 = vmatmul.mubr.f32.gmra.mrb[0].mxu0 %v707
    %v775 = vpop.f32.mrb[0].mxu0
    %v776 = vadd.f32 %v705, %v775
    %v777 = vpop.f32.mrb[0].mxu0
    %v778 = vadd.f32 %v705, %v777
    %779 = vdwg.mxu0
    %s780 = scalar_lea.vmem [#allocation3], 64
    %v781 = vld [vmem:[%s780] sm:$0xff]
    %v782 = vld [vmem:[%s780 + $0x8] sm:$0xff]
    %v783 = vld [vmem:[%s780 + $0x10] sm:$0xff]
    %v784 = vld [vmem:[%s780 + $0x18] sm:$0xff]
    %v785 = vld [vmem:[%s780 + $0x20] sm:$0xff]
    %v786 = vld [vmem:[%s780 + $0x28] sm:$0xff]
    %v787 = vld [vmem:[%s780 + $0x30] sm:$0xff]
    %v788 = vld [vmem:[%s780 + $0x38] sm:$0xff]
    %793 = vrot.lane.b32.xlu0 %v782, 17
    %v794 = vpop.permute.xlu0 %793
    %795 = vrot.lane.b32.xlu0 %v784, 17
    %v796 = vpop.permute.xlu0 %795
    %797 = vrot.lane.b32.xlu0 %v786, 17
    %v798 = vpop.permute.xlu0 %797
    %799 = vrot.lane.b32.xlu0 %v788, 17
    %v800 = vpop.permute.xlu0 %799
    %809 = vrot.lane.b32.xlu0 %v781, 17
    %v810 = vpop.permute.xlu0 %809
    %811 = vrot.lane.b32.xlu0 %v783, 17
    %v812 = vpop.permute.xlu0 %811
    %813 = vrot.lane.b32.xlu0 %v785, 17
    %v814 = vpop.permute.xlu0 %813
    %815 = vrot.lane.b32.xlu0 %v787, 17
    %v816 = vpop.permute.xlu0 %815
    %v817 = vsel %vm158, %v810, %v794
    %v818 = vsel %vm158, %v812, %v796
    %v819 = vsel %vm158, %v814, %v798
    %v820 = vsel %vm158, %v816, %v800
    %v829 = vsel %vm158, %v794, %v810
    %v830 = vsel %vm158, %v796, %v812
    %v831 = vsel %vm158, %v798, %v814
    %v832 = vsel %vm158, %v800, %v816
    %v833 = vsel %vm177, %v829, 0.0
    %v834 = vsel %vm178, %v817, 0.0
    %v835 = vsel %vm177, %v830, 0.0
    %v836 = vsel %vm178, %v818, 0.0
    %v837 = vsel %vm177, %v831, 0.0
    %v838 = vsel %vm178, %v819, 0.0
    %v839 = vsel %vm177, %v832, 0.0
    %v840 = vsel %vm178, %v820, 0.0
    %841 = vrot.lane.b32.xlu0 %v782, 16
    %v842 = vpop.permute.xlu0 %841
    %843 = vrot.lane.b32.xlu0 %v784, 16
    %v844 = vpop.permute.xlu0 %843
    %845 = vrot.lane.b32.xlu0 %v786, 16
    %v846 = vpop.permute.xlu0 %845
    %847 = vrot.lane.b32.xlu0 %v788, 16
    %v848 = vpop.permute.xlu0 %847
    %853 = vrot.lane.b32.xlu0 %v781, 16
    %v854 = vpop.permute.xlu0 %853
    %855 = vrot.lane.b32.xlu0 %v783, 16
    %v856 = vpop.permute.xlu0 %855
    %857 = vrot.lane.b32.xlu0 %v785, 16
    %v858 = vpop.permute.xlu0 %857
    %859 = vrot.lane.b32.xlu0 %v787, 16
    %v860 = vpop.permute.xlu0 %859
    %v861 = vsel %vm207, %v854, %v842
    %v862 = vsel %vm207, %v856, %v844
    %v863 = vsel %vm207, %v858, %v846
    %v864 = vsel %vm207, %v860, %v848
    %v873 = vsel %vm207, %v842, %v854
    %v874 = vsel %vm207, %v844, %v856
    %v875 = vsel %vm207, %v846, %v858
    %v876 = vsel %vm207, %v848, %v860
    %v877 = vsel %vm226, %v873, 0.0
    %v878 = vsel %vm227, %v861, 0.0
    %v879 = vsel %vm226, %v874, 0.0
    %v880 = vsel %vm227, %v862, 0.0
    %v881 = vsel %vm226, %v875, 0.0
    %v882 = vsel %vm227, %v863, 0.0
    %v883 = vsel %vm226, %v876, 0.0
    %v884 = vsel %vm227, %v864, 0.0
    %885 = vrot.lane.b32.xlu0 %v782, 15
    %v886 = vpop.permute.xlu0 %885
    %887 = vrot.lane.b32.xlu0 %v784, 15
    %v888 = vpop.permute.xlu0 %887
    %889 = vrot.lane.b32.xlu0 %v786, 15
    %v890 = vpop.permute.xlu0 %889
    %891 = vrot.lane.b32.xlu0 %v788, 15
    %v892 = vpop.permute.xlu0 %891
    %897 = vrot.lane.b32.xlu0 %v781, 15
    %v898 = vpop.permute.xlu0 %897
    %899 = vrot.lane.b32.xlu0 %v783, 15
    %v900 = vpop.permute.xlu0 %899
    %901 = vrot.lane.b32.xlu0 %v785, 15
    %v902 = vpop.permute.xlu0 %901
    %903 = vrot.lane.b32.xlu0 %v787, 15
    %v904 = vpop.permute.xlu0 %903
    %v905 = vsel %vm256, %v898, %v886
    %v906 = vsel %vm256, %v900, %v888
    %v907 = vsel %vm256, %v902, %v890
    %v908 = vsel %vm256, %v904, %v892
    %v917 = vsel %vm256, %v886, %v898
    %v918 = vsel %vm256, %v888, %v900
    %v919 = vsel %vm256, %v890, %v902
    %v920 = vsel %vm256, %v892, %v904
    %v921 = vsel %vm275, %v917, 0.0
    %v922 = vsel %vm276, %v905, 0.0
    %v923 = vsel %vm275, %v918, 0.0
    %v924 = vsel %vm276, %v906, 0.0
    %v925 = vsel %vm275, %v919, 0.0
    %v926 = vsel %vm276, %v907, 0.0
    %v927 = vsel %vm275, %v920, 0.0
    %v928 = vsel %vm276, %v908, 0.0
    %929 = vrot.lane.b32.xlu0 %v782, 1
    %v930 = vpop.permute.xlu0 %929
    %931 = vrot.lane.b32.xlu0 %v784, 1
    %v932 = vpop.permute.xlu0 %931
    %933 = vrot.lane.b32.xlu0 %v786, 1
    %v934 = vpop.permute.xlu0 %933
    %935 = vrot.lane.b32.xlu0 %v788, 1
    %v936 = vpop.permute.xlu0 %935
    %941 = vrot.lane.b32.xlu0 %v781, 1
    %v942 = vpop.permute.xlu0 %941
    %943 = vrot.lane.b32.xlu0 %v783, 1
    %v944 = vpop.permute.xlu0 %943
    %945 = vrot.lane.b32.xlu0 %v785, 1
    %v946 = vpop.permute.xlu0 %945
    %947 = vrot.lane.b32.xlu0 %v787, 1
    %v948 = vpop.permute.xlu0 %947
    %v949 = vsel %vm305, %v942, %v930
    %v950 = vsel %vm305, %v944, %v932
    %v951 = vsel %vm305, %v946, %v934
    %v952 = vsel %vm305, %v948, %v936
    %v961 = vsel %vm305, %v930, %v942
    %v962 = vsel %vm305, %v932, %v944
    %v963 = vsel %vm305, %v934, %v946
    %v964 = vsel %vm305, %v936, %v948
    %v965 = vsel %vm324, %v961, 0.0
    %v966 = vsel %vm325, %v949, 0.0
    %v967 = vsel %vm324, %v962, 0.0
    %v968 = vsel %vm325, %v950, 0.0
    %v969 = vsel %vm324, %v963, 0.0
    %v970 = vsel %vm325, %v951, 0.0
    %v971 = vsel %vm324, %v964, 0.0
    %v972 = vsel %vm325, %v952, 0.0
    %973 = vrot.lane.b32.xlu0 %v781, 127
    %v974 = vpop.permute.xlu0 %973
    %975 = vrot.lane.b32.xlu0 %v782, 127
    %v976 = vpop.permute.xlu0 %975
    %977 = vrot.lane.b32.xlu0 %v783, 127
    %v978 = vpop.permute.xlu0 %977
    %979 = vrot.lane.b32.xlu0 %v784, 127
    %v980 = vpop.permute.xlu0 %979
    %981 = vrot.lane.b32.xlu0 %v785, 127
    %v982 = vpop.permute.xlu0 %981
    %983 = vrot.lane.b32.xlu0 %v786, 127
    %v984 = vpop.permute.xlu0 %983
    %985 = vrot.lane.b32.xlu0 %v787, 127
    %v986 = vpop.permute.xlu0 %985
    %987 = vrot.lane.b32.xlu0 %v788, 127
    %v988 = vpop.permute.xlu0 %987
    %v989 = vsel %vm350, %v974, %v976
    %v990 = vsel %vm350, %v978, %v980
    %v991 = vsel %vm350, %v982, %v984
    %v992 = vsel %vm350, %v986, %v988
    %v1005 = vsel %vm350, %v976, %v974
    %v1006 = vsel %vm350, %v980, %v978
    %v1007 = vsel %vm350, %v984, %v982
    %v1008 = vsel %vm350, %v988, %v986
    %v1009 = vsel %vm373, %v989, 0.0
    %v1010 = vsel %vm374, %v1005, 0.0
    %v1011 = vsel %vm373, %v990, 0.0
    %v1012 = vsel %vm374, %v1006, 0.0
    %v1013 = vsel %vm373, %v991, 0.0
    %v1014 = vsel %vm374, %v1007, 0.0
    %v1015 = vsel %vm373, %v992, 0.0
    %v1016 = vsel %vm374, %v1008, 0.0
    %1017 = vrot.lane.b32.xlu0 %v781, 113
    %v1018 = vpop.permute.xlu0 %1017
    %1019 = vrot.lane.b32.xlu0 %v782, 113
    %v1020 = vpop.permute.xlu0 %1019
    %1021 = vrot.lane.b32.xlu0 %v783, 113
    %v1022 = vpop.permute.xlu0 %1021
    %1023 = vrot.lane.b32.xlu0 %v784, 113
    %v1024 = vpop.permute.xlu0 %1023
    %1025 = vrot.lane.b32.xlu0 %v785, 113
    %v1026 = vpop.permute.xlu0 %1025
    %1027 = vrot.lane.b32.xlu0 %v786, 113
    %v1028 = vpop.permute.xlu0 %1027
    %1029 = vrot.lane.b32.xlu0 %v787, 113
    %v1030 = vpop.permute.xlu0 %1029
    %1031 = vrot.lane.b32.xlu0 %v788, 113
    %v1032 = vpop.permute.xlu0 %1031
    %v1033 = vsel %vm399, %v1018, %v1020
    %v1034 = vsel %vm399, %v1022, %v1024
    %v1035 = vsel %vm399, %v1026, %v1028
    %v1036 = vsel %vm399, %v1030, %v1032
    %v1049 = vsel %vm399, %v1020, %v1018
    %v1050 = vsel %vm399, %v1024, %v1022
    %v1051 = vsel %vm399, %v1028, %v1026
    %v1052 = vsel %vm399, %v1032, %v1030
    %v1053 = vsel %vm422, %v1033, 0.0
    %v1054 = vsel %vm423, %v1049, 0.0
    %v1055 = vsel %vm422, %v1034, 0.0
    %v1056 = vsel %vm423, %v1050, 0.0
    %v1057 = vsel %vm422, %v1035, 0.0
    %v1058 = vsel %vm423, %v1051, 0.0
    %v1059 = vsel %vm422, %v1036, 0.0
    %v1060 = vsel %vm423, %v1052, 0.0
    %1061 = vrot.lane.b32.xlu0 %v781, 112
    %v1062 = vpop.permute.xlu0 %1061
    %1063 = vrot.lane.b32.xlu0 %v782, 112
    %v1064 = vpop.permute.xlu0 %1063
    %1065 = vrot.lane.b32.xlu0 %v783, 112
    %v1066 = vpop.permute.xlu0 %1065
    %1067 = vrot.lane.b32.xlu0 %v784, 112
    %v1068 = vpop.permute.xlu0 %1067
    %1069 = vrot.lane.b32.xlu0 %v785, 112
    %v1070 = vpop.permute.xlu0 %1069
    %1071 = vrot.lane.b32.xlu0 %v786, 112
    %v1072 = vpop.permute.xlu0 %1071
    %1073 = vrot.lane.b32.xlu0 %v787, 112
    %v1074 = vpop.permute.xlu0 %1073
    %1075 = vrot.lane.b32.xlu0 %v788, 112
    %v1076 = vpop.permute.xlu0 %1075
    %v1077 = vsel %vm448, %v1062, %v1064
    %v1078 = vsel %vm448, %v1066, %v1068
    %v1079 = vsel %vm448, %v1070, %v1072
    %v1080 = vsel %vm448, %v1074, %v1076
    %v1093 = vsel %vm448, %v1064, %v1062
    %v1094 = vsel %vm448, %v1068, %v1066
    %v1095 = vsel %vm448, %v1072, %v1070
    %v1096 = vsel %vm448, %v1076, %v1074
    %v1097 = vsel %vm471, %v1077, 0.0
    %v1098 = vsel %vm472, %v1093, 0.0
    %v1099 = vsel %vm471, %v1078, 0.0
    %v1100 = vsel %vm472, %v1094, 0.0
    %v1101 = vsel %vm471, %v1079, 0.0
    %v1102 = vsel %vm472, %v1095, 0.0
    %v1103 = vsel %vm471, %v1080, 0.0
    %v1104 = vsel %vm472, %v1096, 0.0
    %1105 = vrot.lane.b32.xlu0 %v781, 111
    %v1106 = vpop.permute.xlu0 %1105
    %1107 = vrot.lane.b32.xlu0 %v782, 111
    %v1108 = vpop.permute.xlu0 %1107
    %1109 = vrot.lane.b32.xlu0 %v783, 111
    %v1110 = vpop.permute.xlu0 %1109
    %1111 = vrot.lane.b32.xlu0 %v784, 111
    %v1112 = vpop.permute.xlu0 %1111
    %1113 = vrot.lane.b32.xlu0 %v785, 111
    %v1114 = vpop.permute.xlu0 %1113
    %1115 = vrot.lane.b32.xlu0 %v786, 111
    %v1116 = vpop.permute.xlu0 %1115
    %1117 = vrot.lane.b32.xlu0 %v787, 111
    %v1118 = vpop.permute.xlu0 %1117
    %1119 = vrot.lane.b32.xlu0 %v788, 111
    %v1120 = vpop.permute.xlu0 %1119
    %v1121 = vsel %vm497, %v1106, %v1108
    %v1122 = vsel %vm497, %v1110, %v1112
    %v1123 = vsel %vm497, %v1114, %v1116
    %v1124 = vsel %vm497, %v1118, %v1120
    %v1137 = vsel %vm497, %v1108, %v1106
    %v1138 = vsel %vm497, %v1112, %v1110
    %v1139 = vsel %vm497, %v1116, %v1114
    %v1140 = vsel %vm497, %v1120, %v1118
    %v1141 = vsel %vm520, %v1121, 0.0
    %v1142 = vsel %vm521, %v1137, 0.0
    %v1143 = vsel %vm520, %v1122, 0.0
    %v1144 = vsel %vm521, %v1138, 0.0
    %v1145 = vsel %vm520, %v1123, 0.0
    %v1146 = vsel %vm521, %v1139, 0.0
    %v1147 = vsel %vm520, %v1124, 0.0
    %v1148 = vsel %vm521, %v1140, 0.0
    %1149 = vmatprep.subr.mxu0 %v834
    %1150 = vmatpush1.msra.mxu0 %v833
    %1151 = vmatprep.subr.mxu0 %v836
    %1152 = vmatpush1.msra.mxu0 %v835
    %1153 = vmatprep.subr.mxu0 %v838
    %1154 = vmatpush1.msra.mxu0 %v837
    %1155 = vmatprep.subr.mxu0 %v840
    %1156 = vmatpush1.msra.mxu0 %v839
    %1157 = vmatprep.subr.mxu0 %v878
    %1158 = vmatpush1.msra.mxu0 %v877
    %1159 = vmatprep.subr.mxu0 %v880
    %1160 = vmatpush1.msra.mxu0 %v879
    %1161 = vmatprep.subr.mxu0 %v882
    %1162 = vmatpush1.msra.mxu0 %v881
    %1163 = vmatprep.subr.mxu0 %v884
    %1164 = vmatpush1.msra.mxu0 %v883
    %1165 = vmatprep.subr.mxu0 %v922
    %1166 = vmatpush1.msra.mxu0 %v921
    %1167 = vmatprep.subr.mxu0 %v924
    %1168 = vmatpush1.msra.mxu0 %v923
    %1169 = vmatprep.subr.mxu0 %v926
    %1170 = vmatpush1.msra.mxu0 %v925
    %1171 = vmatprep.subr.mxu0 %v928
    %1172 = vmatpush1.msra.mxu0 %v927
    %1173 = vmatprep.subr.mxu0 %v966
    %1174 = vmatpush1.msra.mxu0 %v965
    %1175 = vmatprep.subr.mxu0 %v968
    %1176 = vmatpush1.msra.mxu0 %v967
    %1177 = vmatprep.subr.mxu0 %v970
    %1178 = vmatpush1.msra.mxu0 %v969
    %1179 = vmatprep.subr.mxu0 %v972
    %1180 = vmatpush1.msra.mxu0 %v971
    %1181 = vmatprep.subr.mxu0 %v782
    %1182 = vmatpush1.msra.mxu0 %v781
    %1183 = vmatprep.subr.mxu0 %v784
    %1184 = vmatpush1.msra.mxu0 %v783
    %1185 = vmatprep.subr.mxu0 %v786
    %1186 = vmatpush1.msra.mxu0 %v785
    %1187 = vmatprep.subr.mxu0 %v788
    %1188 = vmatpush1.msra.mxu0 %v787
    %1189 = vmatprep.subr.mxu0 %v1010
    %1190 = vmatpush1.msra.mxu0 %v1009
    %1191 = vmatprep.subr.mxu0 %v1012
    %1192 = vmatpush1.msra.mxu0 %v1011
    %1193 = vmatprep.subr.mxu0 %v1014
    %1194 = vmatpush1.msra.mxu0 %v1013
    %1195 = vmatprep.subr.mxu0 %v1016
    %1196 = vmatpush1.msra.mxu0 %v1015
    %1197 = vmatprep.subr.mxu0 %v1054
    %1198 = vmatpush1.msra.mxu0 %v1053
    %1199 = vmatprep.subr.mxu0 %v1056
    %1200 = vmatpush1.msra.mxu0 %v1055
    %1201 = vmatprep.subr.mxu0 %v1058
    %1202 = vmatpush1.msra.mxu0 %v1057
    %1203 = vmatprep.subr.mxu0 %v1060
    %1204 = vmatpush1.msra.mxu0 %v1059
    %1205 = vmatprep.subr.mxu0 %v1098
    %1206 = vmatpush1.msra.mxu0 %v1097
    %1207 = vmatprep.subr.mxu0 %v1100
    %1208 = vmatpush1.msra.mxu0 %v1099
    %1209 = vmatprep.subr.mxu0 %v1102
    %1210 = vmatpush1.msra.mxu0 %v1101
    %1211 = vmatprep.subr.mxu0 %v1104
    %1212 = vmatpush1.msra.mxu0 %v1103
    %1213 = vmatprep.mubr.f32.mxu0 %v113
    %1214 = vmatmul.mubr.f32.gmra.mrb[0].mxu0 %v112
    %v1215 = vpop.f32.mrb[0].mxu0
    %v1216 = vadd.f32 %v533, %v1215
    %v1217 = vpop.f32.mrb[0].mxu0
    %v1218 = vadd.f32 %v533, %v1217
    %1219 = vmatprep.mubr.f32.mxu0 %v116
    %1220 = vmatmul.mubr.f32.gmra.mrb[0].mxu0 %v115
    %v1221 = vpop.f32.mrb[0].mxu0
    %v1222 = vadd.f32 %v538, %v1221
    %v1223 = vpop.f32.mrb[0].mxu0
    %v1224 = vadd.f32 %v538, %v1223
    %1225 = vdwg.mxu0
    %1226 = vmatprep.subr.mxu0 %v1142
    %1227 = vmatpush1.msra.mxu0 %v1141
    %1228 = vmatprep.subr.mxu0 %v1144
    %1229 = vmatpush1.msra.mxu0 %v1143
    %1230 = vmatprep.subr.mxu0 %v1146
    %1231 = vmatpush1.msra.mxu0 %v1145
    %1232 = vmatprep.subr.mxu0 %v1148
    %1233 = vmatpush1.msra.mxu0 %v1147
    %1234 = vmatprep.subr.mxu0 0.0
    %1235 = vmatpush1.msra.mxu0 0.0
    %1236 = vmatprep.subr.mxu0 0.0
    %1237 = vmatpush1.msra.mxu0 0.0
    %1238 = vmatprep.subr.mxu0 0.0
    %1239 = vmatpush1.msra.mxu0 0.0
    %1240 = vmatprep.subr.mxu0 0.0
    %1241 = vmatpush1.msra.mxu0 0.0
    %1242 = vmatprep.subr.mxu0 0.0
    %1243 = vmatpush1.msra.mxu0 0.0
    %1244 = vmatprep.subr.mxu0 0.0
    %1245 = vmatpush1.msra.mxu0 0.0
    %1246 = vmatprep.subr.mxu0 0.0
    %1247 = vmatpush1.msra.mxu0 0.0
    %1248 = vmatprep.subr.mxu0 0.0
    %1249 = vmatpush1.msra.mxu0 0.0
    %1250 = vmatprep.subr.mxu0 0.0
    %1251 = vmatpush1.msra.mxu0 0.0
    %1252 = vmatprep.subr.mxu0 0.0
    %1253 = vmatpush1.msra.mxu0 0.0
    %1254 = vmatprep.subr.mxu0 0.0
    %1255 = vmatpush1.msra.mxu0 0.0
    %1256 = vmatprep.subr.mxu0 0.0
    %1257 = vmatpush1.msra.mxu0 0.0
    %1258 = vmatprep.subr.mxu0 0.0
    %1259 = vmatpush1.msra.mxu0 0.0
    %1260 = vmatprep.subr.mxu0 0.0
    %1261 = vmatpush1.msra.mxu0 0.0
    %1262 = vmatprep.subr.mxu0 0.0
    %1263 = vmatpush1.msra.mxu0 0.0
    %1264 = vmatprep.subr.mxu0 0.0
    %1265 = vmatpush1.msra.mxu0 0.0
    %1266 = vmatprep.subr.mxu0 0.0
    %1267 = vmatpush1.msra.mxu0 0.0
    %1268 = vmatprep.subr.mxu0 0.0
    %1269 = vmatpush1.msra.mxu0 0.0
    %1270 = vmatprep.subr.mxu0 0.0
    %1271 = vmatpush1.msra.mxu0 0.0
    %1272 = vmatprep.subr.mxu0 0.0
    %1273 = vmatpush1.msra.mxu0 0.0
    %1274 = vmatprep.subr.mxu0 0.0
    %1275 = vmatpush1.msra.mxu0 0.0
    %1276 = vmatprep.subr.mxu0 0.0
    %1277 = vmatpush1.msra.mxu0 0.0
    %1278 = vmatprep.subr.mxu0 0.0
    %1279 = vmatpush1.msra.mxu0 0.0
    %1280 = vmatprep.subr.mxu0 0.0
    %1281 = vmatpush1.msra.mxu0 0.0
    %1282 = vmatprep.subr.mxu0 0.0
    %1283 = vmatpush1.msra.mxu0 0.0
    %1284 = vmatprep.subr.mxu0 0.0
    %1285 = vmatpush1.msra.mxu0 0.0
    %1286 = vmatprep.subr.mxu0 0.0
    %1287 = vmatpush1.msra.mxu0 0.0
    %1288 = vmatprep.subr.mxu0 0.0
    %1289 = vmatpush1.msra.mxu0 0.0
    %1290 = vmatprep.mubr.f32.mxu0 0.0
    %1291 = vmatmul.mubr.f32.gmra.mrb[0].mxu0 %v542
    %v1292 = vpop.f32.mrb[0].mxu0
    %v1293 = vadd.f32 %v1216, %v1292
    %v1294 = vpop.f32.mrb[0].mxu0
    %v1295 = vadd.f32 %v1218, %v1294
    %1296 = vmatprep.mubr.f32.mxu0 0.0
    %1297 = vmatmul.mubr.f32.gmra.mrb[0].mxu0 %v545
    %v1298 = vpop.f32.mrb[0].mxu0
    %v1299 = vadd.f32 %v1222, %v1298
    %v1300 = vpop.f32.mrb[0].mxu0
    %v1301 = vadd.f32 %v1224, %v1300
    %1302 = vdwg.mxu0
    %v1303 = vmax.f32 %v1293, 0.0
    %v1304 = vmax.f32 %v1295, 0.0
    %v1305 = vmax.f32 %v1299, 0.0
    %v1306 = vmax.f32 %v1301, 0.0
    %1307 = vmatprep.subr.mxu0 %v1304
    %1308 = vmatpush1.msra.mxu0 %v1303
    %1309 = vmatprep.subr.mxu0 %v1306
    %1310 = vmatpush1.msra.mxu0 %v1305
    %1311 = vmatprep.subr.mxu0 0.0
    %1312 = vmatpush1.msra.mxu0 0.0
    %1313 = vmatprep.subr.mxu0 0.0
    %1314 = vmatpush1.msra.mxu0 0.0
    %1315 = vmatprep.subr.mxu0 0.0
    %1316 = vmatpush1.msra.mxu0 0.0
    %1317 = vmatprep.subr.mxu0 0.0
    %1318 = vmatpush1.msra.mxu0 0.0
    %1319 = vmatprep.subr.mxu0 0.0
    %1320 = vmatpush1.msra.mxu0 0.0
    %1321 = vmatprep.subr.mxu0 0.0
    %1322 = vmatpush1.msra.mxu0 0.0
    %1323 = vmatprep.subr.mxu0 0.0
    %1324 = vmatpush1.msra.mxu0 0.0
    %1325 = vmatprep.subr.mxu0 0.0
    %1326 = vmatpush1.msra.mxu0 0.0
    %1327 = vmatprep.subr.mxu0 0.0
    %1328 = vmatpush1.msra.mxu0 0.0
    %1329 = vmatprep.subr.mxu0 0.0
    %1330 = vmatpush1.msra.mxu0 0.0
    %1331 = vmatprep.subr.mxu0 0.0
    %1332 = vmatpush1.msra.mxu0 0.0
    %1333 = vmatprep.subr.mxu0 0.0
    %1334 = vmatpush1.msra.mxu0 0.0
    %1335 = vmatprep.subr.mxu0 0.0
    %1336 = vmatpush1.msra.mxu0 0.0
    %1337 = vmatprep.subr.mxu0 0.0
    %1338 = vmatpush1.msra.mxu0 0.0
    %1339 = vmatprep.subr.mxu0 0.0
    %1340 = vmatpush1.msra.mxu0 0.0
    %1341 = vmatprep.subr.mxu0 0.0
    %1342 = vmatpush1.msra.mxu0 0.0
    %1343 = vmatprep.subr.mxu0 0.0
    %1344 = vmatpush1.msra.mxu0 0.0
    %1345 = vmatprep.subr.mxu0 0.0
    %1346 = vmatpush1.msra.mxu0 0.0
    %1347 = vmatprep.subr.mxu0 0.0
    %1348 = vmatpush1.msra.mxu0 0.0
    %1349 = vmatprep.subr.mxu0 0.0
    %1350 = vmatpush1.msra.mxu0 0.0
    %1351 = vmatprep.subr.mxu0 0.0
    %1352 = vmatpush1.msra.mxu0 0.0
    %1353 = vmatprep.subr.mxu0 0.0
    %1354 = vmatpush1.msra.mxu0 0.0
    %1355 = vmatprep.subr.mxu0 0.0
    %1356 = vmatpush1.msra.mxu0 0.0
    %1357 = vmatprep.subr.mxu0 0.0
    %1358 = vmatpush1.msra.mxu0 0.0
    %1359 = vmatprep.subr.mxu0 0.0
    %1360 = vmatpush1.msra.mxu0 0.0
    %1361 = vmatprep.subr.mxu0 0.0
    %1362 = vmatpush1.msra.mxu0 0.0
    %1363 = vmatprep.subr.mxu0 0.0
    %1364 = vmatpush1.msra.mxu0 0.0
    %1365 = vmatprep.subr.mxu0 0.0
    %1366 = vmatpush1.msra.mxu0 0.0
    %1367 = vmatprep.subr.mxu0 0.0
    %1368 = vmatpush1.msra.mxu0 0.0
    %1369 = vmatprep.subr.mxu0 0.0
    %1370 = vmatpush1.msra.mxu0 0.0
    %1371 = vmatprep.mubr.f32.mxu0 0.0
    %1372 = vmatmul.mubr.f32.gmra.mrb[0].mxu0 %v707
    %v1373 = vpop.f32.mrb[0].mxu0
    %v1374 = vadd.f32 %v705, %v1373
    %v1375 = vpop.f32.mrb[0].mxu0
    %v1376 = vadd.f32 %v705, %v1375
    %1377 = vdwg.mxu0
    %v1380 = vrot.slane %v1374, 7
    %v1381 = vrot.slane %v1376, 7
    %vm1384 = vcmask 1040384
    %v1385 = vsel %vm1384, %v776, %v1380
    %v1386 = vsel %vm1384, %v778, %v1381
    %v1389 = vcombine.low %v1385, %v1386
    %v1391 = vunpack.c.l.s4 1983009808
    %v1392 = vunpack.c.0.s8 %v1391
    %v1393 = vlaneseq
    %v1394 = vshrl.u32 %v1393, 7
    %v1395 = vsub.s32 %v1392, %v1394
    %v1396 = vrot.slane %v1389, %v1395
    %1398 = vst [vmem:[#allocation9] sm:$0xf] %v1396
    %v1399 = vxor.u32 %v1385, 2147483648
    %v1400 = vxor.u32 %v1386, 2147483648
    %v1401 = vmul.f32 %v1399, 1.442695
    %v1402 = vpow.pop %v1401
    %v1403 = vmul.f32 %v1400, 1.442695
    %v1404 = vpow.pop %v1403
    %v1405 = vadd.f32 %v1402, 1.0
    %v1406 = vadd.f32 %v1404, 1.0
    %v1407 = vrcp.pop %v1405
    %v1408 = vmul.f32 1.0, %v1407
    %v1409 = vrcp.pop %v1406
    %v1410 = vmul.f32 1.0, %v1409
    %v1411 = vld [vmem:[#allocation8] sm:$0xff]
    %v1412 = vld [vmem:[#allocation8 + $0x8] sm:$0xff]
    %v1413 = vld [vmem:[#allocation8 + $0x10] sm:$0xff]
    %v1414 = vld [vmem:[#allocation8 + $0x18] sm:$0xff]
    %v1415 = vld [vmem:[#allocation8 + $0x20] sm:$0xff]
    %v1416 = vld [vmem:[#allocation8 + $0x28] sm:$0xff]
    %v1417 = vld [vmem:[#allocation8 + $0x30] sm:$0xff]
    %v1418 = vld [vmem:[#allocation8 + $0x38] sm:$0xff]
    %v1419 = vld [vmem:[#allocation8 + $0x40] sm:$0xff]
    %v1420 = vld [vmem:[#allocation8 + $0x48] sm:$0xff]
    %v1421 = vld [vmem:[#allocation8 + $0x50] sm:$0xff]
    %v1422 = vld [vmem:[#allocation8 + $0x58] sm:$0xff]
    %v1423 = vld [vmem:[#allocation8 + $0x60] sm:$0xff]
    %v1424 = vld [vmem:[#allocation8 + $0x68] sm:$0xff]
    %v1425 = vld [vmem:[#allocation8 + $0x70] sm:$0xff]
    %v1426 = vld [vmem:[#allocation8 + $0x78] sm:$0xff]
    %v1427 = vld [vmem:[#allocation8 + $0x80] sm:$0xff]
    %v1428 = vld [vmem:[#allocation8 + $0x88] sm:$0xff]
    %v1429 = vld [vmem:[#allocation8 + $0x90] sm:$0xff]
    %v1430 = vld [vmem:[#allocation8 + $0x98] sm:$0xff]
    %v1431 = vld [vmem:[#allocation8 + $0xa0] sm:$0xff]
    %v1432 = vld [vmem:[#allocation8 + $0xa8] sm:$0xff]
    %v1433 = vld [vmem:[#allocation8 + $0xb0] sm:$0xff]
    %v1434 = vld [vmem:[#allocation8 + $0xb8] sm:$0xff]
    %v1435 = vld [vmem:[#allocation8 + $0xc0] sm:$0xff]
    %v1436 = vld [vmem:[#allocation8 + $0xc8] sm:$0xff]
    %v1437 = vld [vmem:[#allocation8 + $0xd0] sm:$0xff]
    %v1438 = vld [vmem:[#allocation8 + $0xd8] sm:$0xff]
    %v1439 = vld [vmem:[#allocation8 + $0xe0] sm:$0xff]
    %v1440 = vld [vmem:[#allocation8 + $0xe8] sm:$0xff]
    %v1441 = vld [vmem:[#allocation8 + $0xf0] sm:$0xff]
    %v1442 = vld [vmem:[#allocation8 + $0xf8] sm:$0xff]
    %1443 = vmatprep.subr.mxu0 0.0
    %1444 = vmatpush1.msra.mxu0 %v1411
    %1445 = vmatprep.subr.mxu0 0.0
    %1446 = vmatpush1.msra.mxu0 %v1412
    %1447 = vmatprep.subr.mxu0 0.0
    %1448 = vmatpush1.msra.mxu0 %v1413
    %1449 = vmatprep.subr.mxu0 0.0
    %1450 = vmatpush1.msra.mxu0 %v1414
    %1451 = vmatprep.subr.mxu0 0.0
    %1452 = vmatpush1.msra.mxu0 %v1415
    %1453 = vmatprep.subr.mxu0 0.0
    %1454 = vmatpush1.msra.mxu0 %v1416
    %1455 = vmatprep.subr.mxu0 0.0
    %1456 = vmatpush1.msra.mxu0 %v1417
    %1457 = vmatprep.subr.mxu0 0.0
    %1458 = vmatpush1.msra.mxu0 %v1418
    %1459 = vmatprep.subr.mxu0 0.0
    %1460 = vmatpush1.msra.mxu0 %v1419
    %1461 = vmatprep.subr.mxu0 0.0
    %1462 = vmatpush1.msra.mxu0 %v1420
    %1463 = vmatprep.subr.mxu0 0.0
    %1464 = vmatpush1.msra.mxu0 %v1421
    %1465 = vmatprep.subr.mxu0 0.0
    %1466 = vmatpush1.msra.mxu0 %v1422
    %1467 = vmatprep.subr.mxu0 0.0
    %1468 = vmatpush1.msra.mxu0 %v1423
    %1469 = vmatprep.subr.mxu0 0.0
    %1470 = vmatpush1.msra.mxu0 %v1424
    %1471 = vmatprep.subr.mxu0 0.0
    %1472 = vmatpush1.msra.mxu0 %v1425
    %1473 = vmatprep.subr.mxu0 0.0
    %1474 = vmatpush1.msra.mxu0 %v1426
    %1475 = vmatprep.subr.mxu0 0.0
    %1476 = vmatpush1.msra.mxu0 %v1427
    %1477 = vmatprep.subr.mxu0 0.0
    %1478 = vmatpush1.msra.mxu0 %v1428
    %1479 = vmatprep.subr.mxu0 0.0
    %1480 = vmatpush1.msra.mxu0 %v1429
    %1481 = vmatprep.subr.mxu0 0.0
    %1482 = vmatpush1.msra.mxu0 %v1430
    %1483 = vmatprep.subr.mxu0 0.0
    %1484 = vmatpush1.msra.mxu0 %v1431
    %1485 = vmatprep.subr.mxu0 0.0
    %1486 = vmatpush1.msra.mxu0 %v1432
    %1487 = vmatprep.subr.mxu0 0.0
    %1488 = vmatpush1.msra.mxu0 %v1433
    %1489 = vmatprep.subr.mxu0 0.0
    %1490 = vmatpush1.msra.mxu0 %v1434
    %1491 = vmatprep.subr.mxu0 0.0
    %1492 = vmatpush1.msra.mxu0 %v1435
    %1493 = vmatprep.subr.mxu0 0.0
    %1494 = vmatpush1.msra.mxu0 %v1436
    %1495 = vmatprep.subr.mxu0 0.0
    %1496 = vmatpush1.msra.mxu0 %v1437
    %1497 = vmatprep.subr.mxu0 0.0
    %1498 = vmatpush1.msra.mxu0 %v1438
    %1499 = vmatprep.subr.mxu0 0.0
    %1500 = vmatpush1.msra.mxu0 %v1439
    %1501 = vmatprep.subr.mxu0 0.0
    %1502 = vmatpush1.msra.mxu0 %v1440
    %1503 = vmatprep.subr.mxu0 0.0
    %1504 = vmatpush1.msra.mxu0 %v1441
    %1505 = vmatprep.subr.mxu0 0.0
    %1506 = vmatpush1.msra.mxu0 %v1442
    %1507 = vmatprep.mubr.f32.mxu0 %v1410
    %1508 = vmatmul.mubr.f32.gmra.mrb[0].mxu0 %v1408
    %v1509 = vpop.f32.mrb[0].mxu0
    %v1510 = vadd.f32 0.0, %v1509
    %v1511 = vpop.f32.mrb[0].mxu0
    %1512 = vdwg.mxu0
    %1513 = vst [vmem:[#allocation10] sm:$0x3] %v1510
    // Predicated region
    $region38: #{tpu_custom_call.1} parent=1 // pred_check
      _
    $region39: #{tpu_custom_call.1} parent=1 // pred_check_branch
      %1515 = sbr.rel (0) target = $region41
    $region40: #{tpu_custom_call.1} parent=1 // pred_region
      %s1517 = ssub.s32 64, 64
      %1518 = vsyncadd [#allocation5], %s1517
      %s1520 = sshll.u32 [#allocation9], 4
      %s1521 = int_to_ptr.vmem [resolvable:$true] %s1520
      %1523 = dma.vmem_to_hbm [thread:$0]  %s1521, 64, %s6, [#allocation5]
    $region41: #{tpu_custom_call.1} parent=1 // pred_fallthru
      _
    // Predicated region
    $region42: #{tpu_custom_call.1} parent=1 // pred_check
      _
    $region43: #{tpu_custom_call.1} parent=1 // pred_check_branch
      %1525 = sbr.rel (0) target = $region45
    $region44: #{tpu_custom_call.1} parent=1 // pred_region
      %s1527 = ssub.s32 32, 32
      %1528 = vsyncadd [#allocation11], %s1527
      %s1530 = sshll.u32 [#allocation10], 4
      %s1531 = int_to_ptr.vmem [resolvable:$true] %s1530
      %1533 = dma.vmem_to_hbm [thread:$0]  %s1531, 32, %s7, [#allocation11]
    $region45: #{tpu_custom_call.1} parent=1 // pred_fallthru
      _
    // Predicated region
    $region46: #{tpu_custom_call.1} parent=1 // pred_check
      _
    $region47: #{tpu_custom_call.1} parent=1 // pred_check_branch
      %1535 = sbr.rel (0) target = $region49
    $region48: #{tpu_custom_call.1} parent=1 // pred_region
      %1536 = dma.done [#allocation5], 64
    $region49: #{tpu_custom_call.1} parent=1 // pred_fallthru
      _
    // Predicated region
    $region50: #{tpu_custom_call.1} parent=1 // pred_check
      _
    $region51: #{tpu_custom_call.1} parent=1 // pred_check_branch
      %1538 = sbr.rel (0) target = $region53
    $region52: #{tpu_custom_call.1} parent=1 // pred_region
      %1539 = dma.done [#allocation11], 32
    $region53: #{tpu_custom_call.1} parent=1 // pred_fallthru
      _
    %1540 = vsyncpa [#allocation4], 1
    %1541 = vsyncpa [#allocation7], 1
    %1542 = vsyncpa [#allocation5], 1
    %1543 = vsyncpa [#allocation11], 1

</llo_original>
